<compile_context>
chip_gen: v7x
topology: tpu7x:2x2x1
jax: 0.10.0
libtpu: 0.0.40
codegen_flags: <defaults>
</compile_context>

<pallas_src>
import functools

import jax
import jax.numpy as jnp
import numpy as np
from jax import lax
from jax.experimental import pallas as pl
from jax.experimental.pallas import tpu as pltpu


def _build_haar_matrix(c: int) -> np.ndarray:
    """(C, C) matrix M (host numpy) such that haar(p) == p @ M (linear map)."""
    p = np.eye(c, dtype=np.float64)          # rows = basis vectors
    length = c // 2
    temp = p.reshape(-1, length, 2)
    a = (temp[:, :, 0] + temp[:, :, 1]) / 2
    detail = (temp[:, :, 0] - temp[:, :, 1]) / 2
    length //= 2
    while length != 16:
        a = a.reshape(-1, length, 2)
        detail = np.concatenate(((a[:, :, 0] - a[:, :, 1]) / 2, detail), axis=1)
        a = (a[:, :, 0] + a[:, :, 1]) / 2
        length //= 2
    return np.concatenate((a, detail), axis=1).astype(np.float32)


def _haar_kernel(x_ref, hm_ref, o_ref, acc_ref, *, hw_total, hw_tile):
    # x_ref:   (1, C, hw_tile)  one batch row / one spatial tile
    # hm_ref:  (C, C)           resident Haar transform matrix
    # o_ref:   (1, 1, C)        per-batch output row (lane-dense single store)
    # acc_ref: (1, C) f32       running spatial sum across the HW grid axis
    k = pl.program_id(1)
    n_k = pl.num_programs(1)

    @pl.when(k == 0)
    def _():
        acc_ref[...] = jnp.zeros_like(acc_ref)

    x = x_ref[...].astype(jnp.float32)                      # (1, C, hw_tile)
    if hw_total % hw_tile != 0:
        # Mask the padded remainder of the final spatial tile.
        col = k * hw_tile + lax.broadcasted_iota(jnp.int32, x.shape, 2)
        x = jnp.where(col < hw_total, x, 0.0)
    acc_ref[...] += jnp.sum(x, axis=2)                      # (1, C)

    @pl.when(k == n_k - 1)
    def _():
        pooled = acc_ref[...] * (1.0 / hw_total)            # spatial mean, (1, C)
        res = jnp.dot(pooled, hm_ref[...],
                      preferred_element_type=jnp.float32,
                      precision=lax.Precision.HIGHEST)      # (1, C)
        o_ref[0] = res.astype(o_ref.dtype)                  # single C-wide store


@jax.jit
def haar_wavelet_block(x):
    """x: (N, C, H, W), C a power of two >= 64. Returns (N, C) float32."""
    n, c, h, w = x.shape
    if c < 64 or (c & (c - 1)) != 0:
        raise ValueError("channel count must be a power of two >= 64")
    hw = h * w

    # NCHW -> (N, C, H*W): metadata-only reshape, no transpose / extra HBM pass.
    x_r = jnp.reshape(x, (n, c, hw))
    hm = jnp.asarray(_build_haar_matrix(c))                 # (C, C), built on host

    # Spatial tile: full HW if small (full-dim exemption), else 512 lanes.
    hw_tile = hw if hw <= 1024 else 512
    n_hw = pl.cdiv(hw, hw_tile)

    itemsize = x.dtype.itemsize
    # Double-buffered input tile + resident Haar matrix + accumulator + output.
    needed = (2 * c * hw_tile * itemsize) + (2 * c * c * 4) + (c * 4) + (2 * c * 4)
    vmem_limit = int(min(64 << 20, max(needed + (4 << 20), 16 << 20)))

    kernel = functools.partial(_haar_kernel, hw_total=hw, hw_tile=hw_tile)

    out3 = pl.pallas_call(
        kernel,
        out_shape=jax.ShapeDtypeStruct((n, 1, c), jnp.float32),
        grid_spec=pltpu.PrefetchScalarGridSpec(
            num_scalar_prefetch=0,
            grid=(n, n_hw),
            in_specs=[
                pl.BlockSpec((1, c, hw_tile), lambda b, k: (b, 0, k)),
                pl.BlockSpec((c, c), lambda b, k: (0, 0)),   # resident, fetched once
            ],
            out_specs=pl.BlockSpec((1, 1, c), lambda b, k: (b, 0, 0)),
            scratch_shapes=[pltpu.VMEM((1, c), jnp.float32)],
        ),
        compiler_params=pltpu.CompilerParams(
            dimension_semantics=("parallel", "arbitrary"),   # batch across TCs (v7x)
            vmem_limit_bytes=vmem_limit),
        cost_estimate=pl.CostEstimate(
            flops=2 * n * c * hw + 2 * n * c * c,
            transcendentals=0,
            bytes_accessed=n * c * hw * itemsize + c * c * 4 + n * c * 4),
    )(x_r, hm)
    return jnp.reshape(out3, (n, c))


def haar_reference(x):
    """Pure-JAX transcription of the PyTorch forward (correctness check)."""
    c = x.shape[1]
    p = jnp.mean(x, axis=(2, 3))
    length = c // 2
    temp = jnp.reshape(p, (-1, length, 2))
    a = (temp[:, :, 0] + temp[:, :, 1]) / 2
    detail = (temp[:, :, 0] - temp[:, :, 1]) / 2
    length //= 2
    while length != 16:
        a = jnp.reshape(a, (-1, length, 2))
        detail = jnp.concatenate(((a[:, :, 0] - a[:, :, 1]) / 2, detail), axis=1)
        a = (a[:, :, 0] + a[:, :, 1]) / 2
        length //= 2
    return jnp.concatenate((a, detail), axis=1)


if __name__ == "__main__":
    key = jax.random.PRNGKey(0)
    k1, k2 = jax.random.split(key)

    # Case 1: small spatial extent (single full-dim HW tile), two Haar levels.
    x1 = jax.random.normal(k1, (2, 128, 8, 8), dtype=jnp.float32)
    out1 = jax.block_until_ready(haar_wavelet_block(x1))
    assert out1.shape == (2, 128), out1.shape
    np.testing.assert_allclose(np.asarray(out1), np.asarray(haar_reference(x1)),
                               rtol=1e-5, atol=1e-5)

    # Case 2: multi-tile spatial reduction with a masked remainder tile.
    x2 = jax.random.normal(k2, (2, 64, 40, 40), dtype=jnp.float32)
    out2 = jax.block_until_ready(haar_wavelet_block(x2))
    assert out2.shape == (2, 64), out2.shape
    np.testing.assert_allclose(np.asarray(out2), np.asarray(haar_reference(x2)),
                               rtol=1e-5, atol=1e-5)

    print("KERNEL_OK")
</pallas_src>

<mosaic_0001>
module attributes {stable_mosaic.version = 11 : i64} {
  func.func @_haar_kernel(%arg0: i32, %arg1: i32, %arg2: memref<1x128x64xf32, #tpu.memory_space<vmem>>, %arg3: memref<128x128xf32, #tpu.memory_space<vmem>>, %arg4: memref<1x1x128xf32, #tpu.memory_space<vmem>>, %arg5: memref<1x128xf32, #tpu.memory_space<vmem>>) attributes {dimension_semantics = [#tpu.dimension_semantics<parallel>, #tpu.dimension_semantics<arbitrary>], iteration_bounds = array<i64: 2, 1>, scalar_prefetch = 0 : i64, scratch_operands = 1 : i64, tpu.core_type = #tpu.core_type<tc>, window_params = [{transform_indices = @transform_0, window_bounds = array<i64: 1, 128, 64>}, {pipeline_mode = #tpu.pipeline_mode<synchronous>, transform_indices = @transform_1, window_bounds = array<i64: 128, 128>}, {transform_indices = @transform_2, window_bounds = array<i64: 1, 1, 128>}]} {
    %c0_i32 = arith.constant 0 : i32
    %0 = arith.cmpi eq, %arg1, %c0_i32 : i32
    %1 = arith.extui %0 : i1 to i32
    %c0_i32_0 = arith.constant 0 : i32
    %2 = arith.cmpi ne, %1, %c0_i32_0 : i32
    scf.if %2 {
      %cst_9 = arith.constant 0.000000e+00 : f32
      %11 = vector.broadcast %cst_9 : f32 to vector<1x128xf32>
      %c0_10 = arith.constant 0 : index
      %c0_11 = arith.constant 0 : index
      %12 = vector.load %arg5[%c0_10, %c0_11] : memref<1x128xf32, #tpu.memory_space<vmem>>, vector<1x128xf32>
      tpu.vector_store %arg5[%c0_10, %c0_11], %11 {strides = array<i32>} : memref<1x128xf32, #tpu.memory_space<vmem>>, vector<1x128xf32>,
    } else {
    }
    %c0 = arith.constant 0 : index
    %c0_1 = arith.constant 0 : index
    %c0_2 = arith.constant 0 : index
    %3 = vector.load %arg2[%c0, %c0_1, %c0_2] : memref<1x128x64xf32, #tpu.memory_space<vmem>>, vector<1x128x64xf32>
    %c0_3 = arith.constant 0 : index
    %c0_4 = arith.constant 0 : index
    %4 = vector.load %arg5[%c0_3, %c0_4] : memref<1x128xf32, #tpu.memory_space<vmem>>, vector<1x128xf32>
    %cst = arith.constant dense<0.000000e+00> : vector<1x128xf32>
    %5 = vector.multi_reduction <add>, %3, %cst [2] : vector<1x128x64xf32> to vector<1x128xf32>
    %6 = arith.addf %4, %5 : vector<1x128xf32>
    %c0_5 = arith.constant 0 : index
    %c0_6 = arith.constant 0 : index
    %7 = vector.load %arg5[%c0_5, %c0_6] : memref<1x128xf32, #tpu.memory_space<vmem>>, vector<1x128xf32>
    tpu.vector_store %arg5[%c0_5, %c0_6], %6 {strides = array<i32>} : memref<1x128xf32, #tpu.memory_space<vmem>>, vector<1x128xf32>,
    %c0_i32_7 = arith.constant 0 : i32
    %8 = arith.cmpi eq, %arg1, %c0_i32_7 : i32
    %9 = arith.extui %8 : i1 to i32
    %c0_i32_8 = arith.constant 0 : i32
    %10 = arith.cmpi ne, %9, %c0_i32_8 : i32
    scf.if %10 {
      %c0_9 = arith.constant 0 : index
      %c0_10 = arith.constant 0 : index
      %11 = vector.load %arg5[%c0_9, %c0_10] : memref<1x128xf32, #tpu.memory_space<vmem>>, vector<1x128xf32>
      %cst_11 = arith.constant 1.562500e-02 : f32
      %12 = vector.broadcast %cst_11 : f32 to vector<1x128xf32>
      %13 = arith.mulf %11, %12 : vector<1x128xf32>
      %c0_12 = arith.constant 0 : index
      %c0_13 = arith.constant 0 : index
      %14 = vector.load %arg3[%c0_12, %c0_13] : memref<128x128xf32, #tpu.memory_space<vmem>>, vector<128x128xf32>
      %cst_14 = arith.constant dense<0.000000e+00> : vector<1x128xf32>
      %15 = tpu.matmul %13, %14, %cst_14 {dimension_numbers = #tpu.dot_dimension_numbers<[1], [0], [0], [1], [0, 0, 1, 1], [], []>, precision = #tpu.contract_precision<fp32>} : vector<1x128xf32>, vector<128x128xf32>, vector<1x128xf32> -> vector<1x128xf32>
      %c0_15 = arith.constant 0 : index
      %c0_16 = arith.constant 0 : index
      %c0_17 = arith.constant 0 : index
      %16 = vector.load %arg4[%c0_15, %c0_16, %c0_17] : memref<1x1x128xf32, #tpu.memory_space<vmem>>, vector<1x1x128xf32>
      %17 = vector.shape_cast %16 : vector<1x1x128xf32> to vector<1x128xf32>
      %18 = vector.shape_cast %15 : vector<1x128xf32> to vector<1x1x128xf32>
      tpu.vector_store %arg4[%c0_15, %c0_16, %c0_17], %18 {strides = array<i32>} : memref<1x1x128xf32, #tpu.memory_space<vmem>>, vector<1x1x128xf32>,
    } else {
    }
    return
  }
  func.func @transform_0(%arg0: i32, %arg1: i32) -> (i32, i32, i32) {
    %c0_i32 = arith.constant 0 : i32
    %c0_i32_0 = arith.constant 0 : i32
    return %arg0, %c0_i32, %arg1 : i32, i32, i32
  }
  func.func @transform_1(%arg0: i32, %arg1: i32) -> (i32, i32) {
    %c0_i32 = arith.constant 0 : i32
    %c0_i32_0 = arith.constant 0 : i32
    %c0_i32_1 = arith.constant 0 : i32
    return %c0_i32, %c0_i32_0 : i32, i32
  }
  func.func @transform_2(%arg0: i32, %arg1: i32) -> (i32, i32, i32) {
    %c0_i32 = arith.constant 0 : i32
    %c0_i32_0 = arith.constant 0 : i32
    %c0_i32_1 = arith.constant 0 : i32
    return %arg0, %c0_i32, %c0_i32_0 : i32, i32, i32
  }
}

</mosaic_0001>

<llo_original>
// kernel: haar_wavelet_block.1
$region0: #{haar_wavelet_block.1}
  #allocation0 [shape = 'u32[]', space=smem, size = 0x4, offset = 0x4, fixed_abs, tag = 'smem constant byte address 0x4 - core index']
  #allocation1 [shape = 'u32[144,128]{1,0:T(1,128)}', space=vmem, size = 0x12000, scoped, tag = 'internal scratch']
  #allocation2 [shape = 'f32[1,128]{1,0:T(1,128)}', space=vmem, size = 0x200, scoped, tag = 'scratch operand']
  %s0 = inlined_call_operand.vmem [shape: f32[2,128,64], index: 0, kind: input, shape index: {}]
  %s1 = inlined_call_operand.vmem [shape: f32[128,128], index: 1, kind: input, shape index: {}]
  %s2 = inlined_call_operand.hbm [shape: f32[2,1,128], index: 2, kind: output, shape index: {}]
  %s3 = sld [smem:[#allocation0]]
  $region49: #{haar_wavelet_block.1} parent=0
    _
  %s5 = ssub.s32 1, %s3
  %s6 = scalar_select 0, %s5, %s3
  $region1: #{haar_wavelet_block.1} parent=0
    #allocation3 [shape = 'u8[1024]{0}', space=vmem, size = 0x400, scoped, tag = 'output window, operand 0']
    #allocation4 [shape = 's32[2]{0}', space=sflag, size = 0x8, scoped, tag = 'scoped memory for haar_wavelet_block.1']
    %7 = vsyncpa [#allocation4], 0
    %s8 = scalar_lea.sflag [#allocation4], 1
    %9 = vsyncpa %s8, 0
    loop: start=0, step=1, limit=4
    $region2: #{haar_wavelet_block.1} parent=1 // loop_pre_header
      _
    $region3: #{haar_wavelet_block.1} parent=1 // loop_header
      %s11 = sphi 0, %s15
      %p12 = scmp.ge.s32.totalorder %s11, 4
      %s18 = sphi 0, %s30
      %s19 = sphi 0, %s26
      %s20 = sphi 0, %s18
      %s21 = sphi 0, %s19
      %s22 = sphi 0, %s20
      %s23 = sphi 0, %s21
      %s35 = sphi 0, %s37
      %s38 = sphi 0, %s35
      %s39 = sphi 0, %s38
      %s55 = sphi 0, %s39
      %s59 = sphi 0, %s59
      %s61 = sphi 0, %s59
      %s62 = sphi 0, %s61
      %s76 = sphi 0, %s62
      %s82 = sphi 0, %s84
      %s85 = sphi 0, %s82
      %s86 = sphi 0, %s85
      %s102 = sphi 0, %s86
    $region4: #{haar_wavelet_block.1} parent=1 // loop_header_branch
      %14 = sbr.rel (%p12) target = $region8
    $region5: #{haar_wavelet_block.1} parent=1 // loop_body
      %s16 = ssub.s32 %s11, 1
      %s17 = ssub.s32 %s11, 2
      %s24 = sadd.s32 1, %s19
      %p25 = scmp.ge.s32.totalorder %s24, 1
      %s26 = scalar_select %p25, 0, %s24
      %s27 = sadd.s32 1, %s18
      %s28 = scalar_select %p25, %s27, %s18
      %p29 = scmp.ge.s32.totalorder %s28, 2
      %s30 = scalar_select %p29, 0, %s28
      %s31 = ssub.s32 %s18, %s30
      %s32 = ssub.s32 %s19, %s26
      %s33 = sor.u32 %s31, %s32
      %p34 = scmp.eq.s32.totalorder %s33, 0
      %s36 = sadd.s32 %s35, 1
      %s37 = scalar_select %p34, %s35, %s36
      %p40 = pneg %p34
      %p41 = scmp.eq.s32.totalorder %s11, 1
      %p42 = por %p40, %p41
      %p43 = scmp.ne.s32.totalorder %s35, %s38
      %p44 = scmp.eq.s32.totalorder %s11, 0
      %p45 = por %p43, %p44
      %p46 = scmp.ne.s32.totalorder %s35, %s38
      %p47 = scmp.eq.s32.totalorder %s16, 1
      %p48 = por %p46, %p47
      %p49 = scmp.ne.s32.totalorder %s38, %s39
      %p50 = scmp.eq.s32.totalorder %s16, 0
      %p51 = por %p49, %p50
      %p52 = scmp.ne.s32.totalorder %s38, %s39
      %p53 = scmp.eq.s32.totalorder %s17, 1
      %p54 = por %p52, %p53
      %p56 = scmp.ne.s32.totalorder %s39, %s55
      %p57 = scmp.eq.s32.totalorder %s17, 0
      %p58 = por %p56, %p57
      %s60 = sadd.s32 %s59, 1
      %p63 = scmp.eq.s32.totalorder %s11, 1
      %p64 = scmp.ne.s32.totalorder %s59, %s61
      %p65 = scmp.eq.s32.totalorder %s11, 0
      %p66 = por %p64, %p65
      %p67 = scmp.ne.s32.totalorder %s59, %s61
      %p68 = scmp.eq.s32.totalorder %s16, 1
      %p69 = por %p67, %p68
      %p70 = scmp.ne.s32.totalorder %s61, %s62
      %p71 = scmp.eq.s32.totalorder %s16, 0
      %p72 = por %p70, %p71
      %p73 = scmp.ne.s32.totalorder %s61, %s62
      %p74 = scmp.eq.s32.totalorder %s17, 1
      %p75 = por %p73, %p74
      %p77 = scmp.ne.s32.totalorder %s62, %s76
      %p78 = scmp.eq.s32.totalorder %s17, 0
      %p79 = por %p77, %p78
      %s80 = ssub.s32 %s18, %s30
      %p81 = scmp.eq.s32.totalorder %s80, 0
      %s83 = sadd.s32 %s82, 1
      %s84 = scalar_select %p81, %s82, %s83
      %p87 = pneg %p81
      %p88 = scmp.eq.s32.totalorder %s11, 1
      %p89 = por %p87, %p88
      %p90 = scmp.ne.s32.totalorder %s82, %s85
      %p91 = scmp.eq.s32.totalorder %s11, 0
      %p92 = por %p90, %p91
      %p93 = scmp.ne.s32.totalorder %s82, %s85
      %p94 = scmp.eq.s32.totalorder %s16, 1
      %p95 = por %p93, %p94
      %p96 = scmp.ne.s32.totalorder %s85, %s86
      %p97 = scmp.eq.s32.totalorder %s16, 0
      %p98 = por %p96, %p97
      %p99 = scmp.ne.s32.totalorder %s85, %s86
      %p100 = scmp.eq.s32.totalorder %s17, 1
      %p101 = por %p99, %p100
      %p103 = scmp.ne.s32.totalorder %s86, %s102
      %p104 = scmp.eq.s32.totalorder %s17, 0
      %p105 = por %p103, %p104
      %p106 = scmp.le.s32.totalorder 1, %s11
      %p107 = scmp.lt.s32.totalorder %s11, 3
      %p108 = pnand %p106, %p107
      %p109 = pneg %p108
      // Predicated region
      $region9: #{haar_wavelet_block.1} parent=5 // pred_check
        _
      $region10: #{haar_wavelet_block.1} parent=5 // pred_check_branch
        %111 = sbr.rel (%p108) target = $region12
      $region11: #{haar_wavelet_block.1} parent=5 // pred_region
        %s112 = ssub.s32 %s11, 1
        // Predicated region
        $region13: #{haar_wavelet_block.1} parent=11 // pred_check
          %p113 = pneg %p72
        $region14: #{haar_wavelet_block.1} parent=11 // pred_check_branch
          %115 = sbr.rel (%p113) target = $region16
        $region15: #{haar_wavelet_block.1} parent=11 // pred_region
          _
        $region16: #{haar_wavelet_block.1} parent=11 // pred_fallthru
          _
      $region12: #{haar_wavelet_block.1} parent=5 // pred_fallthru
        _
      %p116 = scmp.lt.s32.totalorder %s11, 2
      // Predicated region
      $region17: #{haar_wavelet_block.1} parent=5 // pred_check
        %p117 = pneg %p116
      $region18: #{haar_wavelet_block.1} parent=5 // pred_check_branch
        %119 = sbr.rel (%p117) target = $region20
      $region19: #{haar_wavelet_block.1} parent=5 // pred_region
        // Predicated region
        $region21: #{haar_wavelet_block.1} parent=19 // pred_check
          %p120 = pneg %p45
        $region22: #{haar_wavelet_block.1} parent=19 // pred_check_branch
          %122 = sbr.rel (%p120) target = $region24
        $region23: #{haar_wavelet_block.1} parent=19 // pred_region
          %p123 = scmp.lt.s32.totalorder %s18, 1
          %s124 = scalar_select %p123, %s18, 1
          %p125 = scmp.lt.s32.totalorder %s19, 0
          %s126 = scalar_select %p125, %s19, 0
          %s127 = smul.addr %s124, 16
          %s128 = sadd.s32 %s126, %s127
          %s129 = smul.addr %s128, 8
          %s130 = scalar_lea.vmem %s0, %s129
        $region24: #{haar_wavelet_block.1} parent=19 // pred_fallthru
          _
      $region20: #{haar_wavelet_block.1} parent=5 // pred_fallthru
        _
      %p131 = scmp.le.s32.totalorder 1, %s11
      %p132 = scmp.lt.s32.totalorder %s11, 3
      %p133 = pnand %p131, %p132
      %p134 = pneg %p133
      // Predicated region
      $region25: #{haar_wavelet_block.1} parent=5 // pred_check
        _
      $region26: #{haar_wavelet_block.1} parent=5 // pred_check_branch
        %136 = sbr.rel (%p133) target = $region28
      $region27: #{haar_wavelet_block.1} parent=5 // pred_region
        %s137 = ssub.s32 %s11, 1
        %p138 = scmp.lt.s32.totalorder %s20, 1
        %s139 = scalar_select %p138, %s20, 1
        %p140 = scmp.lt.s32.totalorder %s21, 0
        %s141 = scalar_select %p140, %s21, 0
        %s142 = smul.addr %s139, 16
        %s143 = sadd.s32 %s141, %s142
        %s144 = smul.addr %s143, 8
        %s145 = scalar_lea.vmem %s0, %s144
        %p146 = pneg %p51
        %p147 = pneg %p48
        %p148 = pneg %p72
        %p149 = pneg %p69
        %p150 = pneg %p98
        %p151 = pneg %p95
        %s152 = sand.u32 %s85, 1
        %s153 = scalar_lea.sflag [#allocation4], %s152
        %s154 = sand.u32 %s85, 1
        %s155 = scalar_lea.vmem [#allocation3], %s154
        %p156 = scmp.lt.s32.totalorder %s20, 1
        %s157 = scalar_select %p156, %s20, 1
        %p158 = scmp.lt.s32.totalorder %s21, 0
        %s159 = scalar_select %p158, %s21, 0
        %s160 = smul.addr %s157, 16
        %s161 = sadd.s32 %s159, %s160
        %s162 = smul.addr %s161, 8
        %s163 = scalar_lea.vmem %s0, %s162
        %p164 = scmp.eq.s32.totalorder %s21, 0
        // Predicated region
        $region29: #{haar_wavelet_block.1} parent=27 // pred_check
          %p165 = pneg %p164
        $region30: #{haar_wavelet_block.1} parent=27 // pred_check_branch
          %167 = sbr.rel (%p165) target = $region32
        $region31: #{haar_wavelet_block.1} parent=27 // pred_region
          %168 = vst [vmem:[#allocation2] sm:$0x1] 0.0
        $region32: #{haar_wavelet_block.1} parent=27 // pred_fallthru
          _
        %v169 = vld [vmem:[%s163] sm:$0xff]
        %v170 = vld [vmem:[%s163 + $0x8] sm:$0xff]
        %v171 = vld [vmem:[%s163 + $0x10] sm:$0xff]
        %v172 = vld [vmem:[%s163 + $0x18] sm:$0xff]
        %v173 = vld [vmem:[%s163 + $0x20] sm:$0xff]
        %v174 = vld [vmem:[%s163 + $0x28] sm:$0xff]
        %v175 = vld [vmem:[%s163 + $0x30] sm:$0xff]
        %v176 = vld [vmem:[%s163 + $0x38] sm:$0xff]
        %v177 = vld [vmem:[%s163 + $0x40] sm:$0xff]
        %v178 = vld [vmem:[%s163 + $0x48] sm:$0xff]
        %v179 = vld [vmem:[%s163 + $0x50] sm:$0xff]
        %v180 = vld [vmem:[%s163 + $0x58] sm:$0xff]
        %v181 = vld [vmem:[%s163 + $0x60] sm:$0xff]
        %v182 = vld [vmem:[%s163 + $0x68] sm:$0xff]
        %v183 = vld [vmem:[%s163 + $0x70] sm:$0xff]
        %v184 = vld [vmem:[%s163 + $0x78] sm:$0xff]
        %v185 = vld [vmem:[#allocation2] sm:$0x1]
        %vm186 = vcmask 523264
        %v187 = vsel %vm186, %v169, 0.0
        %188 = vadd.xlane.f32.xlu0 %v187
        %v189 = vpop.xlane.xlu0 %188
        %v190 = vsel %vm186, %v170, 0.0
        %191 = vadd.xlane.f32.xlu0 %v190
        %v192 = vpop.xlane.xlu0 %191
        %v193 = vsel %vm186, %v171, 0.0
        %194 = vadd.xlane.f32.xlu0 %v193
        %v195 = vpop.xlane.xlu0 %194
        %v196 = vsel %vm186, %v172, 0.0
        %197 = vadd.xlane.f32.xlu0 %v196
        %v198 = vpop.xlane.xlu0 %197
        %v199 = vsel %vm186, %v173, 0.0
        %200 = vadd.xlane.f32.xlu0 %v199
        %v201 = vpop.xlane.xlu0 %200
        %v202 = vsel %vm186, %v174, 0.0
        %203 = vadd.xlane.f32.xlu0 %v202
        %v204 = vpop.xlane.xlu0 %203
        %v205 = vsel %vm186, %v175, 0.0
        %206 = vadd.xlane.f32.xlu0 %v205
        %v207 = vpop.xlane.xlu0 %206
        %v208 = vsel %vm186, %v176, 0.0
        %209 = vadd.xlane.f32.xlu0 %v208
        %v210 = vpop.xlane.xlu0 %209
        %v211 = vsel %vm186, %v177, 0.0
        %212 = vadd.xlane.f32.xlu0 %v211
        %v213 = vpop.xlane.xlu0 %212
        %v214 = vsel %vm186, %v178, 0.0
        %215 = vadd.xlane.f32.xlu0 %v214
        %v216 = vpop.xlane.xlu0 %215
        %v217 = vsel %vm186, %v179, 0.0
        %218 = vadd.xlane.f32.xlu0 %v217
        %v219 = vpop.xlane.xlu0 %218
        %v220 = vsel %vm186, %v180, 0.0
        %221 = vadd.xlane.f32.xlu0 %v220
        %v222 = vpop.xlane.xlu0 %221
        %v223 = vsel %vm186, %v181, 0.0
        %224 = vadd.xlane.f32.xlu0 %v223
        %v225 = vpop.xlane.xlu0 %224
        %v226 = vsel %vm186, %v182, 0.0
        %227 = vadd.xlane.f32.xlu0 %v226
        %v228 = vpop.xlane.xlu0 %227
        %v229 = vsel %vm186, %v183, 0.0
        %230 = vadd.xlane.f32.xlu0 %v229
        %v231 = vpop.xlane.xlu0 %230
        %v232 = vsel %vm186, %v184, 0.0
        %233 = vadd.xlane.f32.xlu0 %v232
        %v234 = vpop.xlane.xlu0 %233
        %v251 = vlaneseq
        %v252 = vshrl.u32 %v251, 7
        %v253 = vsub.s32 0, %v252
        %v254 = vrot.slane %v189, %v253
        %v255 = vlaneseq
        %v256 = vshrl.u32 %v255, 7
        %v257 = vsub.s32 1, %v256
        %v258 = vrot.slane %v189, %v257
        %v259 = vlaneseq
        %v260 = vshrl.u32 %v259, 7
        %v261 = vsub.s32 2, %v260
        %v262 = vrot.slane %v189, %v261
        %v263 = vlaneseq
        %v264 = vshrl.u32 %v263, 7
        %v265 = vsub.s32 3, %v264
        %v266 = vrot.slane %v189, %v265
        %v267 = vlaneseq
        %v268 = vshrl.u32 %v267, 7
        %v269 = vsub.s32 4, %v268
        %v270 = vrot.slane %v189, %v269
        %v271 = vlaneseq
        %v272 = vshrl.u32 %v271, 7
        %v273 = vsub.s32 5, %v272
        %v274 = vrot.slane %v189, %v273
        %v275 = vlaneseq
        %v276 = vshrl.u32 %v275, 7
        %v277 = vsub.s32 6, %v276
        %v278 = vrot.slane %v189, %v277
        %v279 = vlaneseq
        %v280 = vshrl.u32 %v279, 7
        %v281 = vsub.s32 7, %v280
        %v282 = vrot.slane %v189, %v281
        %v283 = vlaneseq
        %v284 = vshrl.u32 %v283, 7
        %v285 = vsub.s32 0, %v284
        %v286 = vrot.slane %v192, %v285
        %v287 = vlaneseq
        %v288 = vshrl.u32 %v287, 7
        %v289 = vsub.s32 1, %v288
        %v290 = vrot.slane %v192, %v289
        %v291 = vlaneseq
        %v292 = vshrl.u32 %v291, 7
        %v293 = vsub.s32 2, %v292
        %v294 = vrot.slane %v192, %v293
        %v295 = vlaneseq
        %v296 = vshrl.u32 %v295, 7
        %v297 = vsub.s32 3, %v296
        %v298 = vrot.slane %v192, %v297
        %v299 = vlaneseq
        %v300 = vshrl.u32 %v299, 7
        %v301 = vsub.s32 4, %v300
        %v302 = vrot.slane %v192, %v301
        %v303 = vlaneseq
        %v304 = vshrl.u32 %v303, 7
        %v305 = vsub.s32 5, %v304
        %v306 = vrot.slane %v192, %v305
        %v307 = vlaneseq
        %v308 = vshrl.u32 %v307, 7
        %v309 = vsub.s32 6, %v308
        %v310 = vrot.slane %v192, %v309
        %v311 = vlaneseq
        %v312 = vshrl.u32 %v311, 7
        %v313 = vsub.s32 7, %v312
        %v314 = vrot.slane %v192, %v313
        %v315 = vlaneseq
        %v316 = vshrl.u32 %v315, 7
        %v317 = vsub.s32 0, %v316
        %v318 = vrot.slane %v195, %v317
        %v319 = vlaneseq
        %v320 = vshrl.u32 %v319, 7
        %v321 = vsub.s32 1, %v320
        %v322 = vrot.slane %v195, %v321
        %v323 = vlaneseq
        %v324 = vshrl.u32 %v323, 7
        %v325 = vsub.s32 2, %v324
        %v326 = vrot.slane %v195, %v325
        %v327 = vlaneseq
        %v328 = vshrl.u32 %v327, 7
        %v329 = vsub.s32 3, %v328
        %v330 = vrot.slane %v195, %v329
        %v331 = vlaneseq
        %v332 = vshrl.u32 %v331, 7
        %v333 = vsub.s32 4, %v332
        %v334 = vrot.slane %v195, %v333
        %v335 = vlaneseq
        %v336 = vshrl.u32 %v335, 7
        %v337 = vsub.s32 5, %v336
        %v338 = vrot.slane %v195, %v337
        %v339 = vlaneseq
        %v340 = vshrl.u32 %v339, 7
        %v341 = vsub.s32 6, %v340
        %v342 = vrot.slane %v195, %v341
        %v343 = vlaneseq
        %v344 = vshrl.u32 %v343, 7
        %v345 = vsub.s32 7, %v344
        %v346 = vrot.slane %v195, %v345
        %v347 = vlaneseq
        %v348 = vshrl.u32 %v347, 7
        %v349 = vsub.s32 0, %v348
        %v350 = vrot.slane %v198, %v349
        %v351 = vlaneseq
        %v352 = vshrl.u32 %v351, 7
        %v353 = vsub.s32 1, %v352
        %v354 = vrot.slane %v198, %v353
        %v355 = vlaneseq
        %v356 = vshrl.u32 %v355, 7
        %v357 = vsub.s32 2, %v356
        %v358 = vrot.slane %v198, %v357
        %v359 = vlaneseq
        %v360 = vshrl.u32 %v359, 7
        %v361 = vsub.s32 3, %v360
        %v362 = vrot.slane %v198, %v361
        %v363 = vlaneseq
        %v364 = vshrl.u32 %v363, 7
        %v365 = vsub.s32 4, %v364
        %v366 = vrot.slane %v198, %v365
        %v367 = vlaneseq
        %v368 = vshrl.u32 %v367, 7
        %v369 = vsub.s32 5, %v368
        %v370 = vrot.slane %v198, %v369
        %v371 = vlaneseq
        %v372 = vshrl.u32 %v371, 7
        %v373 = vsub.s32 6, %v372
        %v374 = vrot.slane %v198, %v373
        %v375 = vlaneseq
        %v376 = vshrl.u32 %v375, 7
        %v377 = vsub.s32 7, %v376
        %v378 = vrot.slane %v198, %v377
        %v379 = vlaneseq
        %v380 = vshrl.u32 %v379, 7
        %v381 = vsub.s32 0, %v380
        %v382 = vrot.slane %v201, %v381
        %v383 = vlaneseq
        %v384 = vshrl.u32 %v383, 7
        %v385 = vsub.s32 1, %v384
        %v386 = vrot.slane %v201, %v385
        %v387 = vlaneseq
        %v388 = vshrl.u32 %v387, 7
        %v389 = vsub.s32 2, %v388
        %v390 = vrot.slane %v201, %v389
        %v391 = vlaneseq
        %v392 = vshrl.u32 %v391, 7
        %v393 = vsub.s32 3, %v392
        %v394 = vrot.slane %v201, %v393
        %v395 = vlaneseq
        %v396 = vshrl.u32 %v395, 7
        %v397 = vsub.s32 4, %v396
        %v398 = vrot.slane %v201, %v397
        %v399 = vlaneseq
        %v400 = vshrl.u32 %v399, 7
        %v401 = vsub.s32 5, %v400
        %v402 = vrot.slane %v201, %v401
        %v403 = vlaneseq
        %v404 = vshrl.u32 %v403, 7
        %v405 = vsub.s32 6, %v404
        %v406 = vrot.slane %v201, %v405
        %v407 = vlaneseq
        %v408 = vshrl.u32 %v407, 7
        %v409 = vsub.s32 7, %v408
        %v410 = vrot.slane %v201, %v409
        %v411 = vlaneseq
        %v412 = vshrl.u32 %v411, 7
        %v413 = vsub.s32 0, %v412
        %v414 = vrot.slane %v204, %v413
        %v415 = vlaneseq
        %v416 = vshrl.u32 %v415, 7
        %v417 = vsub.s32 1, %v416
        %v418 = vrot.slane %v204, %v417
        %v419 = vlaneseq
        %v420 = vshrl.u32 %v419, 7
        %v421 = vsub.s32 2, %v420
        %v422 = vrot.slane %v204, %v421
        %v423 = vlaneseq
        %v424 = vshrl.u32 %v423, 7
        %v425 = vsub.s32 3, %v424
        %v426 = vrot.slane %v204, %v425
        %v427 = vlaneseq
        %v428 = vshrl.u32 %v427, 7
        %v429 = vsub.s32 4, %v428
        %v430 = vrot.slane %v204, %v429
        %v431 = vlaneseq
        %v432 = vshrl.u32 %v431, 7
        %v433 = vsub.s32 5, %v432
        %v434 = vrot.slane %v204, %v433
        %v435 = vlaneseq
        %v436 = vshrl.u32 %v435, 7
        %v437 = vsub.s32 6, %v436
        %v438 = vrot.slane %v204, %v437
        %v439 = vlaneseq
        %v440 = vshrl.u32 %v439, 7
        %v441 = vsub.s32 7, %v440
        %v442 = vrot.slane %v204, %v441
        %v443 = vlaneseq
        %v444 = vshrl.u32 %v443, 7
        %v445 = vsub.s32 0, %v444
        %v446 = vrot.slane %v207, %v445
        %v447 = vlaneseq
        %v448 = vshrl.u32 %v447, 7
        %v449 = vsub.s32 1, %v448
        %v450 = vrot.slane %v207, %v449
        %v451 = vlaneseq
        %v452 = vshrl.u32 %v451, 7
        %v453 = vsub.s32 2, %v452
        %v454 = vrot.slane %v207, %v453
        %v455 = vlaneseq
        %v456 = vshrl.u32 %v455, 7
        %v457 = vsub.s32 3, %v456
        %v458 = vrot.slane %v207, %v457
        %v459 = vlaneseq
        %v460 = vshrl.u32 %v459, 7
        %v461 = vsub.s32 4, %v460
        %v462 = vrot.slane %v207, %v461
        %v463 = vlaneseq
        %v464 = vshrl.u32 %v463, 7
        %v465 = vsub.s32 5, %v464
        %v466 = vrot.slane %v207, %v465
        %v467 = vlaneseq
        %v468 = vshrl.u32 %v467, 7
        %v469 = vsub.s32 6, %v468
        %v470 = vrot.slane %v207, %v469
        %v471 = vlaneseq
        %v472 = vshrl.u32 %v471, 7
        %v473 = vsub.s32 7, %v472
        %v474 = vrot.slane %v207, %v473
        %v475 = vlaneseq
        %v476 = vshrl.u32 %v475, 7
        %v477 = vsub.s32 0, %v476
        %v478 = vrot.slane %v210, %v477
        %v479 = vlaneseq
        %v480 = vshrl.u32 %v479, 7
        %v481 = vsub.s32 1, %v480
        %v482 = vrot.slane %v210, %v481
        %v483 = vlaneseq
        %v484 = vshrl.u32 %v483, 7
        %v485 = vsub.s32 2, %v484
        %v486 = vrot.slane %v210, %v485
        %v487 = vlaneseq
        %v488 = vshrl.u32 %v487, 7
        %v489 = vsub.s32 3, %v488
        %v490 = vrot.slane %v210, %v489
        %v491 = vlaneseq
        %v492 = vshrl.u32 %v491, 7
        %v493 = vsub.s32 4, %v492
        %v494 = vrot.slane %v210, %v493
        %v495 = vlaneseq
        %v496 = vshrl.u32 %v495, 7
        %v497 = vsub.s32 5, %v496
        %v498 = vrot.slane %v210, %v497
        %v499 = vlaneseq
        %v500 = vshrl.u32 %v499, 7
        %v501 = vsub.s32 6, %v500
        %v502 = vrot.slane %v210, %v501
        %v503 = vlaneseq
        %v504 = vshrl.u32 %v503, 7
        %v505 = vsub.s32 7, %v504
        %v506 = vrot.slane %v210, %v505
        %v507 = vlaneseq
        %v508 = vshrl.u32 %v507, 7
        %v509 = vsub.s32 0, %v508
        %v510 = vrot.slane %v213, %v509
        %v511 = vlaneseq
        %v512 = vshrl.u32 %v511, 7
        %v513 = vsub.s32 1, %v512
        %v514 = vrot.slane %v213, %v513
        %v515 = vlaneseq
        %v516 = vshrl.u32 %v515, 7
        %v517 = vsub.s32 2, %v516
        %v518 = vrot.slane %v213, %v517
        %v519 = vlaneseq
        %v520 = vshrl.u32 %v519, 7
        %v521 = vsub.s32 3, %v520
        %v522 = vrot.slane %v213, %v521
        %v523 = vlaneseq
        %v524 = vshrl.u32 %v523, 7
        %v525 = vsub.s32 4, %v524
        %v526 = vrot.slane %v213, %v525
        %v527 = vlaneseq
        %v528 = vshrl.u32 %v527, 7
        %v529 = vsub.s32 5, %v528
        %v530 = vrot.slane %v213, %v529
        %v531 = vlaneseq
        %v532 = vshrl.u32 %v531, 7
        %v533 = vsub.s32 6, %v532
        %v534 = vrot.slane %v213, %v533
        %v535 = vlaneseq
        %v536 = vshrl.u32 %v535, 7
        %v537 = vsub.s32 7, %v536
        %v538 = vrot.slane %v213, %v537
        %v539 = vlaneseq
        %v540 = vshrl.u32 %v539, 7
        %v541 = vsub.s32 0, %v540
        %v542 = vrot.slane %v216, %v541
        %v543 = vlaneseq
        %v544 = vshrl.u32 %v543, 7
        %v545 = vsub.s32 1, %v544
        %v546 = vrot.slane %v216, %v545
        %v547 = vlaneseq
        %v548 = vshrl.u32 %v547, 7
        %v549 = vsub.s32 2, %v548
        %v550 = vrot.slane %v216, %v549
        %v551 = vlaneseq
        %v552 = vshrl.u32 %v551, 7
        %v553 = vsub.s32 3, %v552
        %v554 = vrot.slane %v216, %v553
        %v555 = vlaneseq
        %v556 = vshrl.u32 %v555, 7
        %v557 = vsub.s32 4, %v556
        %v558 = vrot.slane %v216, %v557
        %v559 = vlaneseq
        %v560 = vshrl.u32 %v559, 7
        %v561 = vsub.s32 5, %v560
        %v562 = vrot.slane %v216, %v561
        %v563 = vlaneseq
        %v564 = vshrl.u32 %v563, 7
        %v565 = vsub.s32 6, %v564
        %v566 = vrot.slane %v216, %v565
        %v567 = vlaneseq
        %v568 = vshrl.u32 %v567, 7
        %v569 = vsub.s32 7, %v568
        %v570 = vrot.slane %v216, %v569
        %v571 = vlaneseq
        %v572 = vshrl.u32 %v571, 7
        %v573 = vsub.s32 0, %v572
        %v574 = vrot.slane %v219, %v573
        %v575 = vlaneseq
        %v576 = vshrl.u32 %v575, 7
        %v577 = vsub.s32 1, %v576
        %v578 = vrot.slane %v219, %v577
        %v579 = vlaneseq
        %v580 = vshrl.u32 %v579, 7
        %v581 = vsub.s32 2, %v580
        %v582 = vrot.slane %v219, %v581
        %v583 = vlaneseq
        %v584 = vshrl.u32 %v583, 7
        %v585 = vsub.s32 3, %v584
        %v586 = vrot.slane %v219, %v585
        %v587 = vlaneseq
        %v588 = vshrl.u32 %v587, 7
        %v589 = vsub.s32 4, %v588
        %v590 = vrot.slane %v219, %v589
        %v591 = vlaneseq
        %v592 = vshrl.u32 %v591, 7
        %v593 = vsub.s32 5, %v592
        %v594 = vrot.slane %v219, %v593
        %v595 = vlaneseq
        %v596 = vshrl.u32 %v595, 7
        %v597 = vsub.s32 6, %v596
        %v598 = vrot.slane %v219, %v597
        %v599 = vlaneseq
        %v600 = vshrl.u32 %v599, 7
        %v601 = vsub.s32 7, %v600
        %v602 = vrot.slane %v219, %v601
        %v603 = vlaneseq
        %v604 = vshrl.u32 %v603, 7
        %v605 = vsub.s32 0, %v604
        %v606 = vrot.slane %v222, %v605
        %v607 = vlaneseq
        %v608 = vshrl.u32 %v607, 7
        %v609 = vsub.s32 1, %v608
        %v610 = vrot.slane %v222, %v609
        %v611 = vlaneseq
        %v612 = vshrl.u32 %v611, 7
        %v613 = vsub.s32 2, %v612
        %v614 = vrot.slane %v222, %v613
        %v615 = vlaneseq
        %v616 = vshrl.u32 %v615, 7
        %v617 = vsub.s32 3, %v616
        %v618 = vrot.slane %v222, %v617
        %v619 = vlaneseq
        %v620 = vshrl.u32 %v619, 7
        %v621 = vsub.s32 4, %v620
        %v622 = vrot.slane %v222, %v621
        %v623 = vlaneseq
        %v624 = vshrl.u32 %v623, 7
        %v625 = vsub.s32 5, %v624
        %v626 = vrot.slane %v222, %v625
        %v627 = vlaneseq
        %v628 = vshrl.u32 %v627, 7
        %v629 = vsub.s32 6, %v628
        %v630 = vrot.slane %v222, %v629
        %v631 = vlaneseq
        %v632 = vshrl.u32 %v631, 7
        %v633 = vsub.s32 7, %v632
        %v634 = vrot.slane %v222, %v633
        %v635 = vlaneseq
        %v636 = vshrl.u32 %v635, 7
        %v637 = vsub.s32 0, %v636
        %v638 = vrot.slane %v225, %v637
        %v639 = vlaneseq
        %v640 = vshrl.u32 %v639, 7
        %v641 = vsub.s32 1, %v640
        %v642 = vrot.slane %v225, %v641
        %v643 = vlaneseq
        %v644 = vshrl.u32 %v643, 7
        %v645 = vsub.s32 2, %v644
        %v646 = vrot.slane %v225, %v645
        %v647 = vlaneseq
        %v648 = vshrl.u32 %v647, 7
        %v649 = vsub.s32 3, %v648
        %v650 = vrot.slane %v225, %v649
        %v651 = vlaneseq
        %v652 = vshrl.u32 %v651, 7
        %v653 = vsub.s32 4, %v652
        %v654 = vrot.slane %v225, %v653
        %v655 = vlaneseq
        %v656 = vshrl.u32 %v655, 7
        %v657 = vsub.s32 5, %v656
        %v658 = vrot.slane %v225, %v657
        %v659 = vlaneseq
        %v660 = vshrl.u32 %v659, 7
        %v661 = vsub.s32 6, %v660
        %v662 = vrot.slane %v225, %v661
        %v663 = vlaneseq
        %v664 = vshrl.u32 %v663, 7
        %v665 = vsub.s32 7, %v664
        %v666 = vrot.slane %v225, %v665
        %v667 = vlaneseq
        %v668 = vshrl.u32 %v667, 7
        %v669 = vsub.s32 0, %v668
        %v670 = vrot.slane %v228, %v669
        %v671 = vlaneseq
        %v672 = vshrl.u32 %v671, 7
        %v673 = vsub.s32 1, %v672
        %v674 = vrot.slane %v228, %v673
        %v675 = vlaneseq
        %v676 = vshrl.u32 %v675, 7
        %v677 = vsub.s32 2, %v676
        %v678 = vrot.slane %v228, %v677
        %v679 = vlaneseq
        %v680 = vshrl.u32 %v679, 7
        %v681 = vsub.s32 3, %v680
        %v682 = vrot.slane %v228, %v681
        %v683 = vlaneseq
        %v684 = vshrl.u32 %v683, 7
        %v685 = vsub.s32 4, %v684
        %v686 = vrot.slane %v228, %v685
        %v687 = vlaneseq
        %v688 = vshrl.u32 %v687, 7
        %v689 = vsub.s32 5, %v688
        %v690 = vrot.slane %v228, %v689
        %v691 = vlaneseq
        %v692 = vshrl.u32 %v691, 7
        %v693 = vsub.s32 6, %v692
        %v694 = vrot.slane %v228, %v693
        %v695 = vlaneseq
        %v696 = vshrl.u32 %v695, 7
        %v697 = vsub.s32 7, %v696
        %v698 = vrot.slane %v228, %v697
        %v699 = vlaneseq
        %v700 = vshrl.u32 %v699, 7
        %v701 = vsub.s32 0, %v700
        %v702 = vrot.slane %v231, %v701
        %v703 = vlaneseq
        %v704 = vshrl.u32 %v703, 7
        %v705 = vsub.s32 1, %v704
        %v706 = vrot.slane %v231, %v705
        %v707 = vlaneseq
        %v708 = vshrl.u32 %v707, 7
        %v709 = vsub.s32 2, %v708
        %v710 = vrot.slane %v231, %v709
        %v711 = vlaneseq
        %v712 = vshrl.u32 %v711, 7
        %v713 = vsub.s32 3, %v712
        %v714 = vrot.slane %v231, %v713
        %v715 = vlaneseq
        %v716 = vshrl.u32 %v715, 7
        %v717 = vsub.s32 4, %v716
        %v718 = vrot.slane %v231, %v717
        %v719 = vlaneseq
        %v720 = vshrl.u32 %v719, 7
        %v721 = vsub.s32 5, %v720
        %v722 = vrot.slane %v231, %v721
        %v723 = vlaneseq
        %v724 = vshrl.u32 %v723, 7
        %v725 = vsub.s32 6, %v724
        %v726 = vrot.slane %v231, %v725
        %v727 = vlaneseq
        %v728 = vshrl.u32 %v727, 7
        %v729 = vsub.s32 7, %v728
        %v730 = vrot.slane %v231, %v729
        %v731 = vlaneseq
        %v732 = vshrl.u32 %v731, 7
        %v733 = vsub.s32 0, %v732
        %v734 = vrot.slane %v234, %v733
        %v735 = vlaneseq
        %v736 = vshrl.u32 %v735, 7
        %v737 = vsub.s32 1, %v736
        %v738 = vrot.slane %v234, %v737
        %v739 = vlaneseq
        %v740 = vshrl.u32 %v739, 7
        %v741 = vsub.s32 2, %v740
        %v742 = vrot.slane %v234, %v741
        %v743 = vlaneseq
        %v744 = vshrl.u32 %v743, 7
        %v745 = vsub.s32 3, %v744
        %v746 = vrot.slane %v234, %v745
        %v747 = vlaneseq
        %v748 = vshrl.u32 %v747, 7
        %v749 = vsub.s32 4, %v748
        %v750 = vrot.slane %v234, %v749
        %v751 = vlaneseq
        %v752 = vshrl.u32 %v751, 7
        %v753 = vsub.s32 5, %v752
        %v754 = vrot.slane %v234, %v753
        %v755 = vlaneseq
        %v756 = vshrl.u32 %v755, 7
        %v757 = vsub.s32 6, %v756
        %v758 = vrot.slane %v234, %v757
        %v759 = vlaneseq
        %v760 = vshrl.u32 %v759, 7
        %v761 = vsub.s32 7, %v760
        %v762 = vrot.slane %v234, %v761
        %v763 = vcombine.low %v254, %v258
        %v764 = vcombine.low %v262, %v266
        %v765 = vcombine.low %v270, %v274
        %v766 = vcombine.low %v278, %v282
        %v768 = vunpack.c.l.s4 1966171168
        %v769 = vunpack.c.0.s8 %v768
        %v770 = vlaneseq
        %v771 = vshrl.u32 %v770, 7
        %v772 = vsub.s32 %v769, %v771
        %v773 = vrot.slane %v763, %v772
        %v775 = vunpack.c.l.s4 1966171168
        %v776 = vunpack.c.0.s8 %v775
        %v777 = vlaneseq
        %v778 = vshrl.u32 %v777, 7
        %v779 = vsub.s32 %v776, %v778
        %v780 = vrot.slane %v764, %v779
        %v782 = vunpack.c.l.s4 1966171168
        %v783 = vunpack.c.0.s8 %v782
        %v784 = vlaneseq
        %v785 = vshrl.u32 %v784, 7
        %v786 = vsub.s32 %v783, %v785
        %v787 = vrot.slane %v765, %v786
        %v789 = vunpack.c.l.s4 1966171168
        %v790 = vunpack.c.0.s8 %v789
        %v791 = vlaneseq
        %v792 = vshrl.u32 %v791, 7
        %v793 = vsub.s32 %v790, %v792
        %v794 = vrot.slane %v766, %v793
        %v795 = vcombine.low %v773, %v780
        %v796 = vcombine.low %v787, %v794
        %v798 = vunpack.c.l.s4 1966171168
        %v799 = vunpack.c.0.s8 %v798
        %v800 = vlaneseq
        %v801 = vshrl.u32 %v800, 7
        %v802 = vsub.s32 %v799, %v801
        %v803 = vrot.slane %v795, %v802
        %v805 = vunpack.c.l.s4 1966171168
        %v806 = vunpack.c.0.s8 %v805
        %v807 = vlaneseq
        %v808 = vshrl.u32 %v807, 7
        %v809 = vsub.s32 %v806, %v808
        %v810 = vrot.slane %v796, %v809
        %v811 = vcombine.low %v803, %v810
        %v812 = vcombine.low %v286, %v290
        %v813 = vcombine.low %v294, %v298
        %v814 = vcombine.low %v302, %v306
        %v815 = vcombine.low %v310, %v314
        %v817 = vunpack.c.l.s4 1966171168
        %v818 = vunpack.c.0.s8 %v817
        %v819 = vlaneseq
        %v820 = vshrl.u32 %v819, 7
        %v821 = vsub.s32 %v818, %v820
        %v822 = vrot.slane %v812, %v821
        %v824 = vunpack.c.l.s4 1966171168
        %v825 = vunpack.c.0.s8 %v824
        %v826 = vlaneseq
        %v827 = vshrl.u32 %v826, 7
        %v828 = vsub.s32 %v825, %v827
        %v829 = vrot.slane %v813, %v828
        %v831 = vunpack.c.l.s4 1966171168
        %v832 = vunpack.c.0.s8 %v831
        %v833 = vlaneseq
        %v834 = vshrl.u32 %v833, 7
        %v835 = vsub.s32 %v832, %v834
        %v836 = vrot.slane %v814, %v835
        %v838 = vunpack.c.l.s4 1966171168
        %v839 = vunpack.c.0.s8 %v838
        %v840 = vlaneseq
        %v841 = vshrl.u32 %v840, 7
        %v842 = vsub.s32 %v839, %v841
        %v843 = vrot.slane %v815, %v842
        %v844 = vcombine.low %v822, %v829
        %v845 = vcombine.low %v836, %v843
        %v847 = vunpack.c.l.s4 1966171168
        %v848 = vunpack.c.0.s8 %v847
        %v849 = vlaneseq
        %v850 = vshrl.u32 %v849, 7
        %v851 = vsub.s32 %v848, %v850
        %v852 = vrot.slane %v844, %v851
        %v854 = vunpack.c.l.s4 1966171168
        %v855 = vunpack.c.0.s8 %v854
        %v856 = vlaneseq
        %v857 = vshrl.u32 %v856, 7
        %v858 = vsub.s32 %v855, %v857
        %v859 = vrot.slane %v845, %v858
        %v860 = vcombine.low %v852, %v859
        %v861 = vcombine.low %v318, %v322
        %v862 = vcombine.low %v326, %v330
        %v863 = vcombine.low %v334, %v338
        %v864 = vcombine.low %v342, %v346
        %v866 = vunpack.c.l.s4 1966171168
        %v867 = vunpack.c.0.s8 %v866
        %v868 = vlaneseq
        %v869 = vshrl.u32 %v868, 7
        %v870 = vsub.s32 %v867, %v869
        %v871 = vrot.slane %v861, %v870
        %v873 = vunpack.c.l.s4 1966171168
        %v874 = vunpack.c.0.s8 %v873
        %v875 = vlaneseq
        %v876 = vshrl.u32 %v875, 7
        %v877 = vsub.s32 %v874, %v876
        %v878 = vrot.slane %v862, %v877
        %v880 = vunpack.c.l.s4 1966171168
        %v881 = vunpack.c.0.s8 %v880
        %v882 = vlaneseq
        %v883 = vshrl.u32 %v882, 7
        %v884 = vsub.s32 %v881, %v883
        %v885 = vrot.slane %v863, %v884
        %v887 = vunpack.c.l.s4 1966171168
        %v888 = vunpack.c.0.s8 %v887
        %v889 = vlaneseq
        %v890 = vshrl.u32 %v889, 7
        %v891 = vsub.s32 %v888, %v890
        %v892 = vrot.slane %v864, %v891
        %v893 = vcombine.low %v871, %v878
        %v894 = vcombine.low %v885, %v892
        %v896 = vunpack.c.l.s4 1966171168
        %v897 = vunpack.c.0.s8 %v896
        %v898 = vlaneseq
        %v899 = vshrl.u32 %v898, 7
        %v900 = vsub.s32 %v897, %v899
        %v901 = vrot.slane %v893, %v900
        %v903 = vunpack.c.l.s4 1966171168
        %v904 = vunpack.c.0.s8 %v903
        %v905 = vlaneseq
        %v906 = vshrl.u32 %v905, 7
        %v907 = vsub.s32 %v904, %v906
        %v908 = vrot.slane %v894, %v907
        %v909 = vcombine.low %v901, %v908
        %v910 = vcombine.low %v350, %v354
        %v911 = vcombine.low %v358, %v362
        %v912 = vcombine.low %v366, %v370
        %v913 = vcombine.low %v374, %v378
        %v915 = vunpack.c.l.s4 1966171168
        %v916 = vunpack.c.0.s8 %v915
        %v917 = vlaneseq
        %v918 = vshrl.u32 %v917, 7
        %v919 = vsub.s32 %v916, %v918
        %v920 = vrot.slane %v910, %v919
        %v922 = vunpack.c.l.s4 1966171168
        %v923 = vunpack.c.0.s8 %v922
        %v924 = vlaneseq
        %v925 = vshrl.u32 %v924, 7
        %v926 = vsub.s32 %v923, %v925
        %v927 = vrot.slane %v911, %v926
        %v929 = vunpack.c.l.s4 1966171168
        %v930 = vunpack.c.0.s8 %v929
        %v931 = vlaneseq
        %v932 = vshrl.u32 %v931, 7
        %v933 = vsub.s32 %v930, %v932
        %v934 = vrot.slane %v912, %v933
        %v936 = vunpack.c.l.s4 1966171168
        %v937 = vunpack.c.0.s8 %v936
        %v938 = vlaneseq
        %v939 = vshrl.u32 %v938, 7
        %v940 = vsub.s32 %v937, %v939
        %v941 = vrot.slane %v913, %v940
        %v942 = vcombine.low %v920, %v927
        %v943 = vcombine.low %v934, %v941
        %v945 = vunpack.c.l.s4 1966171168
        %v946 = vunpack.c.0.s8 %v945
        %v947 = vlaneseq
        %v948 = vshrl.u32 %v947, 7
        %v949 = vsub.s32 %v946, %v948
        %v950 = vrot.slane %v942, %v949
        %v952 = vunpack.c.l.s4 1966171168
        %v953 = vunpack.c.0.s8 %v952
        %v954 = vlaneseq
        %v955 = vshrl.u32 %v954, 7
        %v956 = vsub.s32 %v953, %v955
        %v957 = vrot.slane %v943, %v956
        %v958 = vcombine.low %v950, %v957
        %v959 = vcombine.low %v382, %v386
        %v960 = vcombine.low %v390, %v394
        %v961 = vcombine.low %v398, %v402
        %v962 = vcombine.low %v406, %v410
        %v964 = vunpack.c.l.s4 1966171168
        %v965 = vunpack.c.0.s8 %v964
        %v966 = vlaneseq
        %v967 = vshrl.u32 %v966, 7
        %v968 = vsub.s32 %v965, %v967
        %v969 = vrot.slane %v959, %v968
        %v971 = vunpack.c.l.s4 1966171168
        %v972 = vunpack.c.0.s8 %v971
        %v973 = vlaneseq
        %v974 = vshrl.u32 %v973, 7
        %v975 = vsub.s32 %v972, %v974
        %v976 = vrot.slane %v960, %v975
        %v978 = vunpack.c.l.s4 1966171168
        %v979 = vunpack.c.0.s8 %v978
        %v980 = vlaneseq
        %v981 = vshrl.u32 %v980, 7
        %v982 = vsub.s32 %v979, %v981
        %v983 = vrot.slane %v961, %v982
        %v985 = vunpack.c.l.s4 1966171168
        %v986 = vunpack.c.0.s8 %v985
        %v987 = vlaneseq
        %v988 = vshrl.u32 %v987, 7
        %v989 = vsub.s32 %v986, %v988
        %v990 = vrot.slane %v962, %v989
        %v991 = vcombine.low %v969, %v976
        %v992 = vcombine.low %v983, %v990
        %v994 = vunpack.c.l.s4 1966171168
        %v995 = vunpack.c.0.s8 %v994
        %v996 = vlaneseq
        %v997 = vshrl.u32 %v996, 7
        %v998 = vsub.s32 %v995, %v997
        %v999 = vrot.slane %v991, %v998
        %v1001 = vunpack.c.l.s4 1966171168
        %v1002 = vunpack.c.0.s8 %v1001
        %v1003 = vlaneseq
        %v1004 = vshrl.u32 %v1003, 7
        %v1005 = vsub.s32 %v1002, %v1004
        %v1006 = vrot.slane %v992, %v1005
        %v1007 = vcombine.low %v999, %v1006
        %v1008 = vcombine.low %v414, %v418
        %v1009 = vcombine.low %v422, %v426
        %v1010 = vcombine.low %v430, %v434
        %v1011 = vcombine.low %v438, %v442
        %v1013 = vunpack.c.l.s4 1966171168
        %v1014 = vunpack.c.0.s8 %v1013
        %v1015 = vlaneseq
        %v1016 = vshrl.u32 %v1015, 7
        %v1017 = vsub.s32 %v1014, %v1016
        %v1018 = vrot.slane %v1008, %v1017
        %v1020 = vunpack.c.l.s4 1966171168
        %v1021 = vunpack.c.0.s8 %v1020
        %v1022 = vlaneseq
        %v1023 = vshrl.u32 %v1022, 7
        %v1024 = vsub.s32 %v1021, %v1023
        %v1025 = vrot.slane %v1009, %v1024
        %v1027 = vunpack.c.l.s4 1966171168
        %v1028 = vunpack.c.0.s8 %v1027
        %v1029 = vlaneseq
        %v1030 = vshrl.u32 %v1029, 7
        %v1031 = vsub.s32 %v1028, %v1030
        %v1032 = vrot.slane %v1010, %v1031
        %v1034 = vunpack.c.l.s4 1966171168
        %v1035 = vunpack.c.0.s8 %v1034
        %v1036 = vlaneseq
        %v1037 = vshrl.u32 %v1036, 7
        %v1038 = vsub.s32 %v1035, %v1037
        %v1039 = vrot.slane %v1011, %v1038
        %v1040 = vcombine.low %v1018, %v1025
        %v1041 = vcombine.low %v1032, %v1039
        %v1043 = vunpack.c.l.s4 1966171168
        %v1044 = vunpack.c.0.s8 %v1043
        %v1045 = vlaneseq
        %v1046 = vshrl.u32 %v1045, 7
        %v1047 = vsub.s32 %v1044, %v1046
        %v1048 = vrot.slane %v1040, %v1047
        %v1050 = vunpack.c.l.s4 1966171168
        %v1051 = vunpack.c.0.s8 %v1050
        %v1052 = vlaneseq
        %v1053 = vshrl.u32 %v1052, 7
        %v1054 = vsub.s32 %v1051, %v1053
        %v1055 = vrot.slane %v1041, %v1054
        %v1056 = vcombine.low %v1048, %v1055
        %v1057 = vcombine.low %v446, %v450
        %v1058 = vcombine.low %v454, %v458
        %v1059 = vcombine.low %v462, %v466
        %v1060 = vcombine.low %v470, %v474
        %v1062 = vunpack.c.l.s4 1966171168
        %v1063 = vunpack.c.0.s8 %v1062
        %v1064 = vlaneseq
        %v1065 = vshrl.u32 %v1064, 7
        %v1066 = vsub.s32 %v1063, %v1065
        %v1067 = vrot.slane %v1057, %v1066
        %v1069 = vunpack.c.l.s4 1966171168
        %v1070 = vunpack.c.0.s8 %v1069
        %v1071 = vlaneseq
        %v1072 = vshrl.u32 %v1071, 7
        %v1073 = vsub.s32 %v1070, %v1072
        %v1074 = vrot.slane %v1058, %v1073
        %v1076 = vunpack.c.l.s4 1966171168
        %v1077 = vunpack.c.0.s8 %v1076
        %v1078 = vlaneseq
        %v1079 = vshrl.u32 %v1078, 7
        %v1080 = vsub.s32 %v1077, %v1079
        %v1081 = vrot.slane %v1059, %v1080
        %v1083 = vunpack.c.l.s4 1966171168
        %v1084 = vunpack.c.0.s8 %v1083
        %v1085 = vlaneseq
        %v1086 = vshrl.u32 %v1085, 7
        %v1087 = vsub.s32 %v1084, %v1086
        %v1088 = vrot.slane %v1060, %v1087
        %v1089 = vcombine.low %v1067, %v1074
        %v1090 = vcombine.low %v1081, %v1088
        %v1092 = vunpack.c.l.s4 1966171168
        %v1093 = vunpack.c.0.s8 %v1092
        %v1094 = vlaneseq
        %v1095 = vshrl.u32 %v1094, 7
        %v1096 = vsub.s32 %v1093, %v1095
        %v1097 = vrot.slane %v1089, %v1096
        %v1099 = vunpack.c.l.s4 1966171168
        %v1100 = vunpack.c.0.s8 %v1099
        %v1101 = vlaneseq
        %v1102 = vshrl.u32 %v1101, 7
        %v1103 = vsub.s32 %v1100, %v1102
        %v1104 = vrot.slane %v1090, %v1103
        %v1105 = vcombine.low %v1097, %v1104
        %v1106 = vcombine.low %v478, %v482
        %v1107 = vcombine.low %v486, %v490
        %v1108 = vcombine.low %v494, %v498
        %v1109 = vcombine.low %v502, %v506
        %v1111 = vunpack.c.l.s4 1966171168
        %v1112 = vunpack.c.0.s8 %v1111
        %v1113 = vlaneseq
        %v1114 = vshrl.u32 %v1113, 7
        %v1115 = vsub.s32 %v1112, %v1114
        %v1116 = vrot.slane %v1106, %v1115
        %v1118 = vunpack.c.l.s4 1966171168
        %v1119 = vunpack.c.0.s8 %v1118
        %v1120 = vlaneseq
        %v1121 = vshrl.u32 %v1120, 7
        %v1122 = vsub.s32 %v1119, %v1121
        %v1123 = vrot.slane %v1107, %v1122
        %v1125 = vunpack.c.l.s4 1966171168
        %v1126 = vunpack.c.0.s8 %v1125
        %v1127 = vlaneseq
        %v1128 = vshrl.u32 %v1127, 7
        %v1129 = vsub.s32 %v1126, %v1128
        %v1130 = vrot.slane %v1108, %v1129
        %v1132 = vunpack.c.l.s4 1966171168
        %v1133 = vunpack.c.0.s8 %v1132
        %v1134 = vlaneseq
        %v1135 = vshrl.u32 %v1134, 7
        %v1136 = vsub.s32 %v1133, %v1135
        %v1137 = vrot.slane %v1109, %v1136
        %v1138 = vcombine.low %v1116, %v1123
        %v1139 = vcombine.low %v1130, %v1137
        %v1141 = vunpack.c.l.s4 1966171168
        %v1142 = vunpack.c.0.s8 %v1141
        %v1143 = vlaneseq
        %v1144 = vshrl.u32 %v1143, 7
        %v1145 = vsub.s32 %v1142, %v1144
        %v1146 = vrot.slane %v1138, %v1145
        %v1148 = vunpack.c.l.s4 1966171168
        %v1149 = vunpack.c.0.s8 %v1148
        %v1150 = vlaneseq
        %v1151 = vshrl.u32 %v1150, 7
        %v1152 = vsub.s32 %v1149, %v1151
        %v1153 = vrot.slane %v1139, %v1152
        %v1154 = vcombine.low %v1146, %v1153
        %v1155 = vcombine.low %v510, %v514
        %v1156 = vcombine.low %v518, %v522
        %v1157 = vcombine.low %v526, %v530
        %v1158 = vcombine.low %v534, %v538
        %v1160 = vunpack.c.l.s4 1966171168
        %v1161 = vunpack.c.0.s8 %v1160
        %v1162 = vlaneseq
        %v1163 = vshrl.u32 %v1162, 7
        %v1164 = vsub.s32 %v1161, %v1163
        %v1165 = vrot.slane %v1155, %v1164
        %v1167 = vunpack.c.l.s4 1966171168
        %v1168 = vunpack.c.0.s8 %v1167
        %v1169 = vlaneseq
        %v1170 = vshrl.u32 %v1169, 7
        %v1171 = vsub.s32 %v1168, %v1170
        %v1172 = vrot.slane %v1156, %v1171
        %v1174 = vunpack.c.l.s4 1966171168
        %v1175 = vunpack.c.0.s8 %v1174
        %v1176 = vlaneseq
        %v1177 = vshrl.u32 %v1176, 7
        %v1178 = vsub.s32 %v1175, %v1177
        %v1179 = vrot.slane %v1157, %v1178
        %v1181 = vunpack.c.l.s4 1966171168
        %v1182 = vunpack.c.0.s8 %v1181
        %v1183 = vlaneseq
        %v1184 = vshrl.u32 %v1183, 7
        %v1185 = vsub.s32 %v1182, %v1184
        %v1186 = vrot.slane %v1158, %v1185
        %v1187 = vcombine.low %v1165, %v1172
        %v1188 = vcombine.low %v1179, %v1186
        %v1190 = vunpack.c.l.s4 1966171168
        %v1191 = vunpack.c.0.s8 %v1190
        %v1192 = vlaneseq
        %v1193 = vshrl.u32 %v1192, 7
        %v1194 = vsub.s32 %v1191, %v1193
        %v1195 = vrot.slane %v1187, %v1194
        %v1197 = vunpack.c.l.s4 1966171168
        %v1198 = vunpack.c.0.s8 %v1197
        %v1199 = vlaneseq
        %v1200 = vshrl.u32 %v1199, 7
        %v1201 = vsub.s32 %v1198, %v1200
        %v1202 = vrot.slane %v1188, %v1201
        %v1203 = vcombine.low %v1195, %v1202
        %v1204 = vcombine.low %v542, %v546
        %v1205 = vcombine.low %v550, %v554
        %v1206 = vcombine.low %v558, %v562
        %v1207 = vcombine.low %v566, %v570
        %v1209 = vunpack.c.l.s4 1966171168
        %v1210 = vunpack.c.0.s8 %v1209
        %v1211 = vlaneseq
        %v1212 = vshrl.u32 %v1211, 7
        %v1213 = vsub.s32 %v1210, %v1212
        %v1214 = vrot.slane %v1204, %v1213
        %v1216 = vunpack.c.l.s4 1966171168
        %v1217 = vunpack.c.0.s8 %v1216
        %v1218 = vlaneseq
        %v1219 = vshrl.u32 %v1218, 7
        %v1220 = vsub.s32 %v1217, %v1219
        %v1221 = vrot.slane %v1205, %v1220
        %v1223 = vunpack.c.l.s4 1966171168
        %v1224 = vunpack.c.0.s8 %v1223
        %v1225 = vlaneseq
        %v1226 = vshrl.u32 %v1225, 7
        %v1227 = vsub.s32 %v1224, %v1226
        %v1228 = vrot.slane %v1206, %v1227
        %v1230 = vunpack.c.l.s4 1966171168
        %v1231 = vunpack.c.0.s8 %v1230
        %v1232 = vlaneseq
        %v1233 = vshrl.u32 %v1232, 7
        %v1234 = vsub.s32 %v1231, %v1233
        %v1235 = vrot.slane %v1207, %v1234
        %v1236 = vcombine.low %v1214, %v1221
        %v1237 = vcombine.low %v1228, %v1235
        %v1239 = vunpack.c.l.s4 1966171168
        %v1240 = vunpack.c.0.s8 %v1239
        %v1241 = vlaneseq
        %v1242 = vshrl.u32 %v1241, 7
        %v1243 = vsub.s32 %v1240, %v1242
        %v1244 = vrot.slane %v1236, %v1243
        %v1246 = vunpack.c.l.s4 1966171168
        %v1247 = vunpack.c.0.s8 %v1246
        %v1248 = vlaneseq
        %v1249 = vshrl.u32 %v1248, 7
        %v1250 = vsub.s32 %v1247, %v1249
        %v1251 = vrot.slane %v1237, %v1250
        %v1252 = vcombine.low %v1244, %v1251
        %v1253 = vcombine.low %v574, %v578
        %v1254 = vcombine.low %v582, %v586
        %v1255 = vcombine.low %v590, %v594
        %v1256 = vcombine.low %v598, %v602
        %v1258 = vunpack.c.l.s4 1966171168
        %v1259 = vunpack.c.0.s8 %v1258
        %v1260 = vlaneseq
        %v1261 = vshrl.u32 %v1260, 7
        %v1262 = vsub.s32 %v1259, %v1261
        %v1263 = vrot.slane %v1253, %v1262
        %v1265 = vunpack.c.l.s4 1966171168
        %v1266 = vunpack.c.0.s8 %v1265
        %v1267 = vlaneseq
        %v1268 = vshrl.u32 %v1267, 7
        %v1269 = vsub.s32 %v1266, %v1268
        %v1270 = vrot.slane %v1254, %v1269
        %v1272 = vunpack.c.l.s4 1966171168
        %v1273 = vunpack.c.0.s8 %v1272
        %v1274 = vlaneseq
        %v1275 = vshrl.u32 %v1274, 7
        %v1276 = vsub.s32 %v1273, %v1275
        %v1277 = vrot.slane %v1255, %v1276
        %v1279 = vunpack.c.l.s4 1966171168
        %v1280 = vunpack.c.0.s8 %v1279
        %v1281 = vlaneseq
        %v1282 = vshrl.u32 %v1281, 7
        %v1283 = vsub.s32 %v1280, %v1282
        %v1284 = vrot.slane %v1256, %v1283
        %v1285 = vcombine.low %v1263, %v1270
        %v1286 = vcombine.low %v1277, %v1284
        %v1288 = vunpack.c.l.s4 1966171168
        %v1289 = vunpack.c.0.s8 %v1288
        %v1290 = vlaneseq
        %v1291 = vshrl.u32 %v1290, 7
        %v1292 = vsub.s32 %v1289, %v1291
        %v1293 = vrot.slane %v1285, %v1292
        %v1295 = vunpack.c.l.s4 1966171168
        %v1296 = vunpack.c.0.s8 %v1295
        %v1297 = vlaneseq
        %v1298 = vshrl.u32 %v1297, 7
        %v1299 = vsub.s32 %v1296, %v1298
        %v1300 = vrot.slane %v1286, %v1299
        %v1301 = vcombine.low %v1293, %v1300
        %v1302 = vcombine.low %v606, %v610
        %v1303 = vcombine.low %v614, %v618
        %v1304 = vcombine.low %v622, %v626
        %v1305 = vcombine.low %v630, %v634
        %v1307 = vunpack.c.l.s4 1966171168
        %v1308 = vunpack.c.0.s8 %v1307
        %v1309 = vlaneseq
        %v1310 = vshrl.u32 %v1309, 7
        %v1311 = vsub.s32 %v1308, %v1310
        %v1312 = vrot.slane %v1302, %v1311
        %v1314 = vunpack.c.l.s4 1966171168
        %v1315 = vunpack.c.0.s8 %v1314
        %v1316 = vlaneseq
        %v1317 = vshrl.u32 %v1316, 7
        %v1318 = vsub.s32 %v1315, %v1317
        %v1319 = vrot.slane %v1303, %v1318
        %v1321 = vunpack.c.l.s4 1966171168
        %v1322 = vunpack.c.0.s8 %v1321
        %v1323 = vlaneseq
        %v1324 = vshrl.u32 %v1323, 7
        %v1325 = vsub.s32 %v1322, %v1324
        %v1326 = vrot.slane %v1304, %v1325
        %v1328 = vunpack.c.l.s4 1966171168
        %v1329 = vunpack.c.0.s8 %v1328
        %v1330 = vlaneseq
        %v1331 = vshrl.u32 %v1330, 7
        %v1332 = vsub.s32 %v1329, %v1331
        %v1333 = vrot.slane %v1305, %v1332
        %v1334 = vcombine.low %v1312, %v1319
        %v1335 = vcombine.low %v1326, %v1333
        %v1337 = vunpack.c.l.s4 1966171168
        %v1338 = vunpack.c.0.s8 %v1337
        %v1339 = vlaneseq
        %v1340 = vshrl.u32 %v1339, 7
        %v1341 = vsub.s32 %v1338, %v1340
        %v1342 = vrot.slane %v1334, %v1341
        %v1344 = vunpack.c.l.s4 1966171168
        %v1345 = vunpack.c.0.s8 %v1344
        %v1346 = vlaneseq
        %v1347 = vshrl.u32 %v1346, 7
        %v1348 = vsub.s32 %v1345, %v1347
        %v1349 = vrot.slane %v1335, %v1348
        %v1350 = vcombine.low %v1342, %v1349
        %v1351 = vcombine.low %v638, %v642
        %v1352 = vcombine.low %v646, %v650
        %v1353 = vcombine.low %v654, %v658
        %v1354 = vcombine.low %v662, %v666
        %v1356 = vunpack.c.l.s4 1966171168
        %v1357 = vunpack.c.0.s8 %v1356
        %v1358 = vlaneseq
        %v1359 = vshrl.u32 %v1358, 7
        %v1360 = vsub.s32 %v1357, %v1359
        %v1361 = vrot.slane %v1351, %v1360
        %v1363 = vunpack.c.l.s4 1966171168
        %v1364 = vunpack.c.0.s8 %v1363
        %v1365 = vlaneseq
        %v1366 = vshrl.u32 %v1365, 7
        %v1367 = vsub.s32 %v1364, %v1366
        %v1368 = vrot.slane %v1352, %v1367
        %v1370 = vunpack.c.l.s4 1966171168
        %v1371 = vunpack.c.0.s8 %v1370
        %v1372 = vlaneseq
        %v1373 = vshrl.u32 %v1372, 7
        %v1374 = vsub.s32 %v1371, %v1373
        %v1375 = vrot.slane %v1353, %v1374
        %v1377 = vunpack.c.l.s4 1966171168
        %v1378 = vunpack.c.0.s8 %v1377
        %v1379 = vlaneseq
        %v1380 = vshrl.u32 %v1379, 7
        %v1381 = vsub.s32 %v1378, %v1380
        %v1382 = vrot.slane %v1354, %v1381
        %v1383 = vcombine.low %v1361, %v1368
        %v1384 = vcombine.low %v1375, %v1382
        %v1386 = vunpack.c.l.s4 1966171168
        %v1387 = vunpack.c.0.s8 %v1386
        %v1388 = vlaneseq
        %v1389 = vshrl.u32 %v1388, 7
        %v1390 = vsub.s32 %v1387, %v1389
        %v1391 = vrot.slane %v1383, %v1390
        %v1393 = vunpack.c.l.s4 1966171168
        %v1394 = vunpack.c.0.s8 %v1393
        %v1395 = vlaneseq
        %v1396 = vshrl.u32 %v1395, 7
        %v1397 = vsub.s32 %v1394, %v1396
        %v1398 = vrot.slane %v1384, %v1397
        %v1399 = vcombine.low %v1391, %v1398
        %v1400 = vcombine.low %v670, %v674
        %v1401 = vcombine.low %v678, %v682
        %v1402 = vcombine.low %v686, %v690
        %v1403 = vcombine.low %v694, %v698
        %v1405 = vunpack.c.l.s4 1966171168
        %v1406 = vunpack.c.0.s8 %v1405
        %v1407 = vlaneseq
        %v1408 = vshrl.u32 %v1407, 7
        %v1409 = vsub.s32 %v1406, %v1408
        %v1410 = vrot.slane %v1400, %v1409
        %v1412 = vunpack.c.l.s4 1966171168
        %v1413 = vunpack.c.0.s8 %v1412
        %v1414 = vlaneseq
        %v1415 = vshrl.u32 %v1414, 7
        %v1416 = vsub.s32 %v1413, %v1415
        %v1417 = vrot.slane %v1401, %v1416
        %v1419 = vunpack.c.l.s4 1966171168
        %v1420 = vunpack.c.0.s8 %v1419
        %v1421 = vlaneseq
        %v1422 = vshrl.u32 %v1421, 7
        %v1423 = vsub.s32 %v1420, %v1422
        %v1424 = vrot.slane %v1402, %v1423
        %v1426 = vunpack.c.l.s4 1966171168
        %v1427 = vunpack.c.0.s8 %v1426
        %v1428 = vlaneseq
        %v1429 = vshrl.u32 %v1428, 7
        %v1430 = vsub.s32 %v1427, %v1429
        %v1431 = vrot.slane %v1403, %v1430
        %v1432 = vcombine.low %v1410, %v1417
        %v1433 = vcombine.low %v1424, %v1431
        %v1435 = vunpack.c.l.s4 1966171168
        %v1436 = vunpack.c.0.s8 %v1435
        %v1437 = vlaneseq
        %v1438 = vshrl.u32 %v1437, 7
        %v1439 = vsub.s32 %v1436, %v1438
        %v1440 = vrot.slane %v1432, %v1439
        %v1442 = vunpack.c.l.s4 1966171168
        %v1443 = vunpack.c.0.s8 %v1442
        %v1444 = vlaneseq
        %v1445 = vshrl.u32 %v1444, 7
        %v1446 = vsub.s32 %v1443, %v1445
        %v1447 = vrot.slane %v1433, %v1446
        %v1448 = vcombine.low %v1440, %v1447
        %v1449 = vcombine.low %v702, %v706
        %v1450 = vcombine.low %v710, %v714
        %v1451 = vcombine.low %v718, %v722
        %v1452 = vcombine.low %v726, %v730
        %v1454 = vunpack.c.l.s4 1966171168
        %v1455 = vunpack.c.0.s8 %v1454
        %v1456 = vlaneseq
        %v1457 = vshrl.u32 %v1456, 7
        %v1458 = vsub.s32 %v1455, %v1457
        %v1459 = vrot.slane %v1449, %v1458
        %v1461 = vunpack.c.l.s4 1966171168
        %v1462 = vunpack.c.0.s8 %v1461
        %v1463 = vlaneseq
        %v1464 = vshrl.u32 %v1463, 7
        %v1465 = vsub.s32 %v1462, %v1464
        %v1466 = vrot.slane %v1450, %v1465
        %v1468 = vunpack.c.l.s4 1966171168
        %v1469 = vunpack.c.0.s8 %v1468
        %v1470 = vlaneseq
        %v1471 = vshrl.u32 %v1470, 7
        %v1472 = vsub.s32 %v1469, %v1471
        %v1473 = vrot.slane %v1451, %v1472
        %v1475 = vunpack.c.l.s4 1966171168
        %v1476 = vunpack.c.0.s8 %v1475
        %v1477 = vlaneseq
        %v1478 = vshrl.u32 %v1477, 7
        %v1479 = vsub.s32 %v1476, %v1478
        %v1480 = vrot.slane %v1452, %v1479
        %v1481 = vcombine.low %v1459, %v1466
        %v1482 = vcombine.low %v1473, %v1480
        %v1484 = vunpack.c.l.s4 1966171168
        %v1485 = vunpack.c.0.s8 %v1484
        %v1486 = vlaneseq
        %v1487 = vshrl.u32 %v1486, 7
        %v1488 = vsub.s32 %v1485, %v1487
        %v1489 = vrot.slane %v1481, %v1488
        %v1491 = vunpack.c.l.s4 1966171168
        %v1492 = vunpack.c.0.s8 %v1491
        %v1493 = vlaneseq
        %v1494 = vshrl.u32 %v1493, 7
        %v1495 = vsub.s32 %v1492, %v1494
        %v1496 = vrot.slane %v1482, %v1495
        %v1497 = vcombine.low %v1489, %v1496
        %v1498 = vcombine.low %v734, %v738
        %v1499 = vcombine.low %v742, %v746
        %v1500 = vcombine.low %v750, %v754
        %v1501 = vcombine.low %v758, %v762
        %v1503 = vunpack.c.l.s4 1966171168
        %v1504 = vunpack.c.0.s8 %v1503
        %v1505 = vlaneseq
        %v1506 = vshrl.u32 %v1505, 7
        %v1507 = vsub.s32 %v1504, %v1506
        %v1508 = vrot.slane %v1498, %v1507
        %v1510 = vunpack.c.l.s4 1966171168
        %v1511 = vunpack.c.0.s8 %v1510
        %v1512 = vlaneseq
        %v1513 = vshrl.u32 %v1512, 7
        %v1514 = vsub.s32 %v1511, %v1513
        %v1515 = vrot.slane %v1499, %v1514
        %v1517 = vunpack.c.l.s4 1966171168
        %v1518 = vunpack.c.0.s8 %v1517
        %v1519 = vlaneseq
        %v1520 = vshrl.u32 %v1519, 7
        %v1521 = vsub.s32 %v1518, %v1520
        %v1522 = vrot.slane %v1500, %v1521
        %v1524 = vunpack.c.l.s4 1966171168
        %v1525 = vunpack.c.0.s8 %v1524
        %v1526 = vlaneseq
        %v1527 = vshrl.u32 %v1526, 7
        %v1528 = vsub.s32 %v1525, %v1527
        %v1529 = vrot.slane %v1501, %v1528
        %v1530 = vcombine.low %v1508, %v1515
        %v1531 = vcombine.low %v1522, %v1529
        %v1533 = vunpack.c.l.s4 1966171168
        %v1534 = vunpack.c.0.s8 %v1533
        %v1535 = vlaneseq
        %v1536 = vshrl.u32 %v1535, 7
        %v1537 = vsub.s32 %v1534, %v1536
        %v1538 = vrot.slane %v1530, %v1537
        %v1540 = vunpack.c.l.s4 1966171168
        %v1541 = vunpack.c.0.s8 %v1540
        %v1542 = vlaneseq
        %v1543 = vshrl.u32 %v1542, 7
        %v1544 = vsub.s32 %v1541, %v1543
        %v1545 = vrot.slane %v1531, %v1544
        %v1546 = vcombine.low %v1538, %v1545
        %1547 = vset.pattern.permute.xlu0 0
        %1548 = vperm.xlu0 %1547, %v811
        %v1549 = vpop.permute.xlu0 %1548
        %1550 = vset.pattern.permute.xlu0 0
        %1551 = vperm.xlu0 %1550, %v860
        %v1552 = vpop.permute.xlu0 %1551
        %1553 = vset.pattern.permute.xlu0 0
        %1554 = vperm.xlu0 %1553, %v909
        %v1555 = vpop.permute.xlu0 %1554
        %1556 = vset.pattern.permute.xlu0 0
        %1557 = vperm.xlu0 %1556, %v958
        %v1558 = vpop.permute.xlu0 %1557
        %1559 = vset.pattern.permute.xlu0 0
        %1560 = vperm.xlu0 %1559, %v1007
        %v1561 = vpop.permute.xlu0 %1560
        %1562 = vset.pattern.permute.xlu0 0
        %1563 = vperm.xlu0 %1562, %v1056
        %v1564 = vpop.permute.xlu0 %1563
        %1565 = vset.pattern.permute.xlu0 0
        %1566 = vperm.xlu0 %1565, %v1105
        %v1567 = vpop.permute.xlu0 %1566
        %1568 = vset.pattern.permute.xlu0 0
        %1569 = vperm.xlu0 %1568, %v1154
        %v1570 = vpop.permute.xlu0 %1569
        %1571 = vset.pattern.permute.xlu0 0
        %1572 = vperm.xlu0 %1571, %v1203
        %v1573 = vpop.permute.xlu0 %1572
        %1574 = vset.pattern.permute.xlu0 0
        %1575 = vperm.xlu0 %1574, %v1252
        %v1576 = vpop.permute.xlu0 %1575
        %1577 = vset.pattern.permute.xlu0 0
        %1578 = vperm.xlu0 %1577, %v1301
        %v1579 = vpop.permute.xlu0 %1578
        %1580 = vset.pattern.permute.xlu0 0
        %1581 = vperm.xlu0 %1580, %v1350
        %v1582 = vpop.permute.xlu0 %1581
        %1583 = vset.pattern.permute.xlu0 0
        %1584 = vperm.xlu0 %1583, %v1399
        %v1585 = vpop.permute.xlu0 %1584
        %1586 = vset.pattern.permute.xlu0 0
        %1587 = vperm.xlu0 %1586, %v1448
        %v1588 = vpop.permute.xlu0 %1587
        %1589 = vset.pattern.permute.xlu0 0
        %1590 = vperm.xlu0 %1589, %v1497
        %v1591 = vpop.permute.xlu0 %1590
        %1592 = vset.pattern.permute.xlu0 0
        %1593 = vperm.xlu0 %1592, %v1546
        %v1594 = vpop.permute.xlu0 %1593
        %v1595 = vlaneseq
        %v1596 = vand.u32 %v1595, 127
        %v1597 = vlaneseq
        %v1598 = vshrl.u32 %v1597, 7
        %v1599 = vsub.s32 %v1596, %v1598
        %v1600 = vrot.slane %v1549, %v1599
        %v1601 = vadd.s32 %v1596, 4294967288
        %v1602 = vlaneseq
        %v1603 = vshrl.u32 %v1602, 7
        %v1604 = vsub.s32 %v1601, %v1603
        %v1605 = vrot.slane %v1552, %v1604
        %vm1606 = vcmask 130112
        %v1607 = vsel %vm1606, %v1605, %v1600
        %v1608 = vadd.s32 %v1596, 4294967280
        %v1609 = vlaneseq
        %v1610 = vshrl.u32 %v1609, 7
        %v1611 = vsub.s32 %v1608, %v1610
        %v1612 = vrot.slane %v1555, %v1611
        %vm1613 = vcmask 195712
        %v1614 = vsel %vm1613, %v1612, %v1607
        %v1615 = vadd.s32 %v1596, 4294967272
        %v1616 = vlaneseq
        %v1617 = vshrl.u32 %v1616, 7
        %v1618 = vsub.s32 %v1615, %v1617
        %v1619 = vrot.slane %v1558, %v1618
        %vm1620 = vcmask 261312
        %v1621 = vsel %vm1620, %v1619, %v1614
        %v1622 = vadd.s32 %v1596, 4294967264
        %v1623 = vlaneseq
        %v1624 = vshrl.u32 %v1623, 7
        %v1625 = vsub.s32 %v1622, %v1624
        %v1626 = vrot.slane %v1561, %v1625
        %vm1627 = vcmask 326912
        %v1628 = vsel %vm1627, %v1626, %v1621
        %v1629 = vadd.s32 %v1596, 4294967256
        %v1630 = vlaneseq
        %v1631 = vshrl.u32 %v1630, 7
        %v1632 = vsub.s32 %v1629, %v1631
        %v1633 = vrot.slane %v1564, %v1632
        %vm1634 = vcmask 392512
        %v1635 = vsel %vm1634, %v1633, %v1628
        %v1636 = vadd.s32 %v1596, 4294967248
        %v1637 = vlaneseq
        %v1638 = vshrl.u32 %v1637, 7
        %v1639 = vsub.s32 %v1636, %v1638
        %v1640 = vrot.slane %v1567, %v1639
        %vm1641 = vcmask 458112
        %v1642 = vsel %vm1641, %v1640, %v1635
        %v1643 = vadd.s32 %v1596, 4294967240
        %v1644 = vlaneseq
        %v1645 = vshrl.u32 %v1644, 7
        %v1646 = vsub.s32 %v1643, %v1645
        %v1647 = vrot.slane %v1570, %v1646
        %vm1648 = vcmask 523712
        %v1649 = vsel %vm1648, %v1647, %v1642
        %v1650 = vadd.s32 %v1596, 4294967232
        %v1651 = vlaneseq
        %v1652 = vshrl.u32 %v1651, 7
        %v1653 = vsub.s32 %v1650, %v1652
        %v1654 = vrot.slane %v1573, %v1653
        %vm1655 = vcmask 589312
        %v1656 = vsel %vm1655, %v1654, %v1649
        %v1657 = vadd.s32 %v1596, 4294967224
        %v1658 = vlaneseq
        %v1659 = vshrl.u32 %v1658, 7
        %v1660 = vsub.s32 %v1657, %v1659
        %v1661 = vrot.slane %v1576, %v1660
        %vm1662 = vcmask 654912
        %v1663 = vsel %vm1662, %v1661, %v1656
        %v1664 = vadd.s32 %v1596, 4294967216
        %v1665 = vlaneseq
        %v1666 = vshrl.u32 %v1665, 7
        %v1667 = vsub.s32 %v1664, %v1666
        %v1668 = vrot.slane %v1579, %v1667
        %vm1669 = vcmask 720512
        %v1670 = vsel %vm1669, %v1668, %v1663
        %v1671 = vadd.s32 %v1596, 4294967208
        %v1672 = vlaneseq
        %v1673 = vshrl.u32 %v1672, 7
        %v1674 = vsub.s32 %v1671, %v1673
        %v1675 = vrot.slane %v1582, %v1674
        %vm1676 = vcmask 786112
        %v1677 = vsel %vm1676, %v1675, %v1670
        %v1678 = vadd.s32 %v1596, 4294967200
        %v1679 = vlaneseq
        %v1680 = vshrl.u32 %v1679, 7
        %v1681 = vsub.s32 %v1678, %v1680
        %v1682 = vrot.slane %v1585, %v1681
        %vm1683 = vcmask 851712
        %v1684 = vsel %vm1683, %v1682, %v1677
        %v1685 = vadd.s32 %v1596, 4294967192
        %v1686 = vlaneseq
        %v1687 = vshrl.u32 %v1686, 7
        %v1688 = vsub.s32 %v1685, %v1687
        %v1689 = vrot.slane %v1588, %v1688
        %vm1690 = vcmask 917312
        %v1691 = vsel %vm1690, %v1689, %v1684
        %v1692 = vadd.s32 %v1596, 4294967184
        %v1693 = vlaneseq
        %v1694 = vshrl.u32 %v1693, 7
        %v1695 = vsub.s32 %v1692, %v1694
        %v1696 = vrot.slane %v1591, %v1695
        %vm1697 = vcmask 982912
        %v1698 = vsel %vm1697, %v1696, %v1691
        %v1699 = vadd.s32 %v1596, 4294967176
        %v1700 = vlaneseq
        %v1701 = vshrl.u32 %v1700, 7
        %v1702 = vsub.s32 %v1699, %v1701
        %v1703 = vrot.slane %v1594, %v1702
        %vm1704 = vcmask 1048512
        %v1705 = vsel %vm1704, %v1703, %v1698
        %v1707 = vunpack.c.l.s4 1966171168
        %v1708 = vunpack.c.0.s8 %v1707
        %v1709 = vlaneseq
        %v1710 = vshrl.u32 %v1709, 7
        %v1711 = vsub.s32 %v1708, %v1710
        %v1712 = vrot.slane %v1705, %v1711
        %v1714 = vunpack.c.l.s4 1966171168
        %v1715 = vunpack.c.0.s8 %v1714
        %v1716 = vlaneseq
        %v1717 = vshrl.u32 %v1716, 7
        %v1718 = vsub.s32 %v1715, %v1717
        %v1719 = vrot.slane %v1712, %v1718
        %v1721 = vadd.f32 %v185, %v1719
        %1722 = vst [vmem:[#allocation2] sm:$0x1] %v1721
        // Predicated region
        $region33: #{haar_wavelet_block.1} parent=27 // pred_check
          %p1723 = pneg %p164
        $region34: #{haar_wavelet_block.1} parent=27 // pred_check_branch
          %1725 = sbr.rel (%p1723) target = $region36
        $region35: #{haar_wavelet_block.1} parent=27 // pred_region
          %v1726 = vld [vmem:[#allocation2] sm:$0x1]
          %v1727 = vmul.f32 %v1726, 0.015625
          %v1728 = vld [vmem:[%s1] sm:$0xff]
          %v1729 = vld [vmem:[%s1 + $0x8] sm:$0xff]
          %v1730 = vld [vmem:[%s1 + $0x10] sm:$0xff]
          %v1731 = vld [vmem:[%s1 + $0x18] sm:$0xff]
          %v1732 = vld [vmem:[%s1 + $0x20] sm:$0xff]
          %v1733 = vld [vmem:[%s1 + $0x28] sm:$0xff]
          %v1734 = vld [vmem:[%s1 + $0x30] sm:$0xff]
          %v1735 = vld [vmem:[%s1 + $0x38] sm:$0xff]
          %v1736 = vld [vmem:[%s1 + $0x40] sm:$0xff]
          %v1737 = vld [vmem:[%s1 + $0x48] sm:$0xff]
          %v1738 = vld [vmem:[%s1 + $0x50] sm:$0xff]
          %v1739 = vld [vmem:[%s1 + $0x58] sm:$0xff]
          %v1740 = vld [vmem:[%s1 + $0x60] sm:$0xff]
          %v1741 = vld [vmem:[%s1 + $0x68] sm:$0xff]
          %v1742 = vld [vmem:[%s1 + $0x70] sm:$0xff]
          %v1743 = vld [vmem:[%s1 + $0x78] sm:$0xff]
          %1744 = vmatprep.subr.mxu0 0.0
          %v1745 = vand.u32 %v1728, 4294901760
          %1746 = vmatpush1.msra.mxu0 %v1745
          %1747 = vmatprep.subr.mxu0 0.0
          %v1748 = vand.u32 %v1729, 4294901760
          %1749 = vmatpush1.msra.mxu0 %v1748
          %1750 = vmatprep.subr.mxu0 0.0
          %v1751 = vand.u32 %v1730, 4294901760
          %1752 = vmatpush1.msra.mxu0 %v1751
          %1753 = vmatprep.subr.mxu0 0.0
          %v1754 = vand.u32 %v1731, 4294901760
          %1755 = vmatpush1.msra.mxu0 %v1754
          %1756 = vmatprep.subr.mxu0 0.0
          %v1757 = vand.u32 %v1732, 4294901760
          %1758 = vmatpush1.msra.mxu0 %v1757
          %1759 = vmatprep.subr.mxu0 0.0
          %v1760 = vand.u32 %v1733, 4294901760
          %1761 = vmatpush1.msra.mxu0 %v1760
          %1762 = vmatprep.subr.mxu0 0.0
          %v1763 = vand.u32 %v1734, 4294901760
          %1764 = vmatpush1.msra.mxu0 %v1763
          %1765 = vmatprep.subr.mxu0 0.0
          %v1766 = vand.u32 %v1735, 4294901760
          %1767 = vmatpush1.msra.mxu0 %v1766
          %1768 = vmatprep.subr.mxu0 0.0
          %v1769 = vand.u32 %v1736, 4294901760
          %1770 = vmatpush1.msra.mxu0 %v1769
          %1771 = vmatprep.subr.mxu0 0.0
          %v1772 = vand.u32 %v1737, 4294901760
          %1773 = vmatpush1.msra.mxu0 %v1772
          %1774 = vmatprep.subr.mxu0 0.0
          %v1775 = vand.u32 %v1738, 4294901760
          %1776 = vmatpush1.msra.mxu0 %v1775
          %1777 = vmatprep.subr.mxu0 0.0
          %v1778 = vand.u32 %v1739, 4294901760
          %1779 = vmatpush1.msra.mxu0 %v1778
          %1780 = vmatprep.subr.mxu0 0.0
          %v1781 = vand.u32 %v1740, 4294901760
          %1782 = vmatpush1.msra.mxu0 %v1781
          %1783 = vmatprep.subr.mxu0 0.0
          %v1784 = vand.u32 %v1741, 4294901760
          %1785 = vmatpush1.msra.mxu0 %v1784
          %1786 = vmatprep.subr.mxu0 0.0
          %v1787 = vand.u32 %v1742, 4294901760
          %1788 = vmatpush1.msra.mxu0 %v1787
          %1789 = vmatprep.subr.mxu0 0.0
          %v1790 = vand.u32 %v1743, 4294901760
          %1791 = vmatpush1.msra.mxu0 %v1790
          %1792 = vmatprep.subr.mxu0 0.0
          %1793 = vmatpush1.msra.mxu0 0.0
          %1794 = vmatprep.subr.mxu0 0.0
          %1795 = vmatpush1.msra.mxu0 0.0
          %1796 = vmatprep.subr.mxu0 0.0
          %1797 = vmatpush1.msra.mxu0 0.0
          %1798 = vmatprep.subr.mxu0 0.0
          %1799 = vmatpush1.msra.mxu0 0.0
          %1800 = vmatprep.subr.mxu0 0.0
          %1801 = vmatpush1.msra.mxu0 0.0
          %1802 = vmatprep.subr.mxu0 0.0
          %1803 = vmatpush1.msra.mxu0 0.0
          %1804 = vmatprep.subr.mxu0 0.0
          %1805 = vmatpush1.msra.mxu0 0.0
          %1806 = vmatprep.subr.mxu0 0.0
          %1807 = vmatpush1.msra.mxu0 0.0
          %1808 = vmatprep.subr.mxu0 0.0
          %1809 = vmatpush1.msra.mxu0 0.0
          %1810 = vmatprep.subr.mxu0 0.0
          %1811 = vmatpush1.msra.mxu0 0.0
          %1812 = vmatprep.subr.mxu0 0.0
          %1813 = vmatpush1.msra.mxu0 0.0
          %1814 = vmatprep.subr.mxu0 0.0
          %1815 = vmatpush1.msra.mxu0 0.0
          %1816 = vmatprep.subr.mxu0 0.0
          %1817 = vmatpush1.msra.mxu0 0.0
          %1818 = vmatprep.subr.mxu0 0.0
          %1819 = vmatpush1.msra.mxu0 0.0
          %1820 = vmatprep.subr.mxu0 0.0
          %1821 = vmatpush1.msra.mxu0 0.0
          %1822 = vmatprep.subr.mxu0 0.0
          %1823 = vmatpush1.msra.mxu0 0.0
          %1824 = vmatprep.mubr.f32.mxu0 0.0
          %v1825 = vand.u32 %v1727, 4294901760
          %v1826 = vsub.f32 %v1727, %v1825
          %v1827 = vand.u32 %v1826, 4294901760
          %v1828 = vsub.f32 %v1826, %v1827
          %v1829 = vand.u32 %v1828, 4294901760
          %1830 = vmatmul.mubr.f32.gmra.mrb[0].mxu0 %v1829
          %v1831 = vpop.f32.mrb[0].mxu0
          %v1832 = vadd.f32 0.0, %v1831
          %v1833 = vpop.f32.mrb[0].mxu0
          %1834 = vdwg.mxu0
          %1835 = vmatprep.subr.mxu0 0.0
          %v1836 = vand.u32 %v1728, 4294901760
          %v1837 = vsub.f32 %v1728, %v1836
          %v1838 = vand.u32 %v1837, 4294901760
          %v1839 = vsub.f32 %v1837, %v1838
          %v1840 = vand.u32 %v1839, 4294901760
          %1841 = vmatpush1.msra.mxu0 %v1840
          %1842 = vmatprep.subr.mxu0 0.0
          %v1843 = vand.u32 %v1729, 4294901760
          %v1844 = vsub.f32 %v1729, %v1843
          %v1845 = vand.u32 %v1844, 4294901760
          %v1846 = vsub.f32 %v1844, %v1845
          %v1847 = vand.u32 %v1846, 4294901760
          %1848 = vmatpush1.msra.mxu0 %v1847
          %1849 = vmatprep.subr.mxu0 0.0
          %v1850 = vand.u32 %v1730, 4294901760
          %v1851 = vsub.f32 %v1730, %v1850
          %v1852 = vand.u32 %v1851, 4294901760
          %v1853 = vsub.f32 %v1851, %v1852
          %v1854 = vand.u32 %v1853, 4294901760
          %1855 = vmatpush1.msra.mxu0 %v1854
          %1856 = vmatprep.subr.mxu0 0.0
          %v1857 = vand.u32 %v1731, 4294901760
          %v1858 = vsub.f32 %v1731, %v1857
          %v1859 = vand.u32 %v1858, 4294901760
          %v1860 = vsub.f32 %v1858, %v1859
          %v1861 = vand.u32 %v1860, 4294901760
          %1862 = vmatpush1.msra.mxu0 %v1861
          %1863 = vmatprep.subr.mxu0 0.0
          %v1864 = vand.u32 %v1732, 4294901760
          %v1865 = vsub.f32 %v1732, %v1864
          %v1866 = vand.u32 %v1865, 4294901760
          %v1867 = vsub.f32 %v1865, %v1866
          %v1868 = vand.u32 %v1867, 4294901760
          %1869 = vmatpush1.msra.mxu0 %v1868
          %1870 = vmatprep.subr.mxu0 0.0
          %v1871 = vand.u32 %v1733, 4294901760
          %v1872 = vsub.f32 %v1733, %v1871
          %v1873 = vand.u32 %v1872, 4294901760
          %v1874 = vsub.f32 %v1872, %v1873
          %v1875 = vand.u32 %v1874, 4294901760
          %1876 = vmatpush1.msra.mxu0 %v1875
          %1877 = vmatprep.subr.mxu0 0.0
          %v1878 = vand.u32 %v1734, 4294901760
          %v1879 = vsub.f32 %v1734, %v1878
          %v1880 = vand.u32 %v1879, 4294901760
          %v1881 = vsub.f32 %v1879, %v1880
          %v1882 = vand.u32 %v1881, 4294901760
          %1883 = vmatpush1.msra.mxu0 %v1882
          %1884 = vmatprep.subr.mxu0 0.0
          %v1885 = vand.u32 %v1735, 4294901760
          %v1886 = vsub.f32 %v1735, %v1885
          %v1887 = vand.u32 %v1886, 4294901760
          %v1888 = vsub.f32 %v1886, %v1887
          %v1889 = vand.u32 %v1888, 4294901760
          %1890 = vmatpush1.msra.mxu0 %v1889
          %1891 = vmatprep.subr.mxu0 0.0
          %v1892 = vand.u32 %v1736, 4294901760
          %v1893 = vsub.f32 %v1736, %v1892
          %v1894 = vand.u32 %v1893, 4294901760
          %v1895 = vsub.f32 %v1893, %v1894
          %v1896 = vand.u32 %v1895, 4294901760
          %1897 = vmatpush1.msra.mxu0 %v1896
          %1898 = vmatprep.subr.mxu0 0.0
          %v1899 = vand.u32 %v1737, 4294901760
          %v1900 = vsub.f32 %v1737, %v1899
          %v1901 = vand.u32 %v1900, 4294901760
          %v1902 = vsub.f32 %v1900, %v1901
          %v1903 = vand.u32 %v1902, 4294901760
          %1904 = vmatpush1.msra.mxu0 %v1903
          %1905 = vmatprep.subr.mxu0 0.0
          %v1906 = vand.u32 %v1738, 4294901760
          %v1907 = vsub.f32 %v1738, %v1906
          %v1908 = vand.u32 %v1907, 4294901760
          %v1909 = vsub.f32 %v1907, %v1908
          %v1910 = vand.u32 %v1909, 4294901760
          %1911 = vmatpush1.msra.mxu0 %v1910
          %1912 = vmatprep.subr.mxu0 0.0
          %v1913 = vand.u32 %v1739, 4294901760
          %v1914 = vsub.f32 %v1739, %v1913
          %v1915 = vand.u32 %v1914, 4294901760
          %v1916 = vsub.f32 %v1914, %v1915
          %v1917 = vand.u32 %v1916, 4294901760
          %1918 = vmatpush1.msra.mxu0 %v1917
          %1919 = vmatprep.subr.mxu0 0.0
          %v1920 = vand.u32 %v1740, 4294901760
          %v1921 = vsub.f32 %v1740, %v1920
          %v1922 = vand.u32 %v1921, 4294901760
          %v1923 = vsub.f32 %v1921, %v1922
          %v1924 = vand.u32 %v1923, 4294901760
          %1925 = vmatpush1.msra.mxu0 %v1924
          %1926 = vmatprep.subr.mxu0 0.0
          %v1927 = vand.u32 %v1741, 4294901760
          %v1928 = vsub.f32 %v1741, %v1927
          %v1929 = vand.u32 %v1928, 4294901760
          %v1930 = vsub.f32 %v1928, %v1929
          %v1931 = vand.u32 %v1930, 4294901760
          %1932 = vmatpush1.msra.mxu0 %v1931
          %1933 = vmatprep.subr.mxu0 0.0
          %v1934 = vand.u32 %v1742, 4294901760
          %v1935 = vsub.f32 %v1742, %v1934
          %v1936 = vand.u32 %v1935, 4294901760
          %v1937 = vsub.f32 %v1935, %v1936
          %v1938 = vand.u32 %v1937, 4294901760
          %1939 = vmatpush1.msra.mxu0 %v1938
          %1940 = vmatprep.subr.mxu0 0.0
          %v1941 = vand.u32 %v1743, 4294901760
          %v1942 = vsub.f32 %v1743, %v1941
          %v1943 = vand.u32 %v1942, 4294901760
          %v1944 = vsub.f32 %v1942, %v1943
          %v1945 = vand.u32 %v1944, 4294901760
          %1946 = vmatpush1.msra.mxu0 %v1945
          %1947 = vmatprep.subr.mxu0 0.0
          %1948 = vmatpush1.msra.mxu0 0.0
          %1949 = vmatprep.subr.mxu0 0.0
          %1950 = vmatpush1.msra.mxu0 0.0
          %1951 = vmatprep.subr.mxu0 0.0
          %1952 = vmatpush1.msra.mxu0 0.0
          %1953 = vmatprep.subr.mxu0 0.0
          %1954 = vmatpush1.msra.mxu0 0.0
          %1955 = vmatprep.subr.mxu0 0.0
          %1956 = vmatpush1.msra.mxu0 0.0
          %1957 = vmatprep.subr.mxu0 0.0
          %1958 = vmatpush1.msra.mxu0 0.0
          %1959 = vmatprep.subr.mxu0 0.0
          %1960 = vmatpush1.msra.mxu0 0.0
          %1961 = vmatprep.subr.mxu0 0.0
          %1962 = vmatpush1.msra.mxu0 0.0
          %1963 = vmatprep.subr.mxu0 0.0
          %1964 = vmatpush1.msra.mxu0 0.0
          %1965 = vmatprep.subr.mxu0 0.0
          %1966 = vmatpush1.msra.mxu0 0.0
          %1967 = vmatprep.subr.mxu0 0.0
          %1968 = vmatpush1.msra.mxu0 0.0
          %1969 = vmatprep.subr.mxu0 0.0
          %1970 = vmatpush1.msra.mxu0 0.0
          %1971 = vmatprep.subr.mxu0 0.0
          %1972 = vmatpush1.msra.mxu0 0.0
          %1973 = vmatprep.subr.mxu0 0.0
          %1974 = vmatpush1.msra.mxu0 0.0
          %1975 = vmatprep.subr.mxu0 0.0
          %1976 = vmatpush1.msra.mxu0 0.0
          %1977 = vmatprep.subr.mxu0 0.0
          %1978 = vmatpush1.msra.mxu0 0.0
          %1979 = vmatprep.mubr.f32.mxu0 0.0
          %v1980 = vand.u32 %v1727, 4294901760
          %1981 = vmatmul.mubr.f32.gmra.mrb[0].mxu0 %v1980
          %v1982 = vpop.f32.mrb[0].mxu0
          %v1983 = vadd.f32 %v1832, %v1982
          %v1984 = vpop.f32.mrb[0].mxu0
          %1985 = vdwg.mxu0
          %1986 = vmatprep.subr.mxu0 0.0
          %v1987 = vand.u32 %v1728, 4294901760
          %v1988 = vsub.f32 %v1728, %v1987
          %1989 = vmatpush1.msra.mxu0 %v1988
          %1990 = vmatprep.subr.mxu0 0.0
          %v1991 = vand.u32 %v1729, 4294901760
          %v1992 = vsub.f32 %v1729, %v1991
          %1993 = vmatpush1.msra.mxu0 %v1992
          %1994 = vmatprep.subr.mxu0 0.0
          %v1995 = vand.u32 %v1730, 4294901760
          %v1996 = vsub.f32 %v1730, %v1995
          %1997 = vmatpush1.msra.mxu0 %v1996
          %1998 = vmatprep.subr.mxu0 0.0
          %v1999 = vand.u32 %v1731, 4294901760
          %v2000 = vsub.f32 %v1731, %v1999
          %2001 = vmatpush1.msra.mxu0 %v2000
          %2002 = vmatprep.subr.mxu0 0.0
          %v2003 = vand.u32 %v1732, 4294901760
          %v2004 = vsub.f32 %v1732, %v2003
          %2005 = vmatpush1.msra.mxu0 %v2004
          %2006 = vmatprep.subr.mxu0 0.0
          %v2007 = vand.u32 %v1733, 4294901760
          %v2008 = vsub.f32 %v1733, %v2007
          %2009 = vmatpush1.msra.mxu0 %v2008
          %2010 = vmatprep.subr.mxu0 0.0
          %v2011 = vand.u32 %v1734, 4294901760
          %v2012 = vsub.f32 %v1734, %v2011
          %2013 = vmatpush1.msra.mxu0 %v2012
          %2014 = vmatprep.subr.mxu0 0.0
          %v2015 = vand.u32 %v1735, 4294901760
          %v2016 = vsub.f32 %v1735, %v2015
          %2017 = vmatpush1.msra.mxu0 %v2016
          %2018 = vmatprep.subr.mxu0 0.0
          %v2019 = vand.u32 %v1736, 4294901760
          %v2020 = vsub.f32 %v1736, %v2019
          %2021 = vmatpush1.msra.mxu0 %v2020
          %2022 = vmatprep.subr.mxu0 0.0
          %v2023 = vand.u32 %v1737, 4294901760
          %v2024 = vsub.f32 %v1737, %v2023
          %2025 = vmatpush1.msra.mxu0 %v2024
          %2026 = vmatprep.subr.mxu0 0.0
          %v2027 = vand.u32 %v1738, 4294901760
          %v2028 = vsub.f32 %v1738, %v2027
          %2029 = vmatpush1.msra.mxu0 %v2028
          %2030 = vmatprep.subr.mxu0 0.0
          %v2031 = vand.u32 %v1739, 4294901760
          %v2032 = vsub.f32 %v1739, %v2031
          %2033 = vmatpush1.msra.mxu0 %v2032
          %2034 = vmatprep.subr.mxu0 0.0
          %v2035 = vand.u32 %v1740, 4294901760
          %v2036 = vsub.f32 %v1740, %v2035
          %2037 = vmatpush1.msra.mxu0 %v2036
          %2038 = vmatprep.subr.mxu0 0.0
          %v2039 = vand.u32 %v1741, 4294901760
          %v2040 = vsub.f32 %v1741, %v2039
          %2041 = vmatpush1.msra.mxu0 %v2040
          %2042 = vmatprep.subr.mxu0 0.0
          %v2043 = vand.u32 %v1742, 4294901760
          %v2044 = vsub.f32 %v1742, %v2043
          %2045 = vmatpush1.msra.mxu0 %v2044
          %2046 = vmatprep.subr.mxu0 0.0
          %v2047 = vand.u32 %v1743, 4294901760
          %v2048 = vsub.f32 %v1743, %v2047
          %2049 = vmatpush1.msra.mxu0 %v2048
          %2050 = vmatprep.subr.mxu0 0.0
          %2051 = vmatpush1.msra.mxu0 0.0
          %2052 = vmatprep.subr.mxu0 0.0
          %2053 = vmatpush1.msra.mxu0 0.0
          %2054 = vmatprep.subr.mxu0 0.0
          %2055 = vmatpush1.msra.mxu0 0.0
          %2056 = vmatprep.subr.mxu0 0.0
          %2057 = vmatpush1.msra.mxu0 0.0
          %2058 = vmatprep.subr.mxu0 0.0
          %2059 = vmatpush1.msra.mxu0 0.0
          %2060 = vmatprep.subr.mxu0 0.0
          %2061 = vmatpush1.msra.mxu0 0.0
          %2062 = vmatprep.subr.mxu0 0.0
          %2063 = vmatpush1.msra.mxu0 0.0
          %2064 = vmatprep.subr.mxu0 0.0
          %2065 = vmatpush1.msra.mxu0 0.0
          %2066 = vmatprep.subr.mxu0 0.0
          %2067 = vmatpush1.msra.mxu0 0.0
          %2068 = vmatprep.subr.mxu0 0.0
          %2069 = vmatpush1.msra.mxu0 0.0
          %2070 = vmatprep.subr.mxu0 0.0
          %2071 = vmatpush1.msra.mxu0 0.0
          %2072 = vmatprep.subr.mxu0 0.0
          %2073 = vmatpush1.msra.mxu0 0.0
          %2074 = vmatprep.subr.mxu0 0.0
          %2075 = vmatpush1.msra.mxu0 0.0
          %2076 = vmatprep.subr.mxu0 0.0
          %2077 = vmatpush1.msra.mxu0 0.0
          %2078 = vmatprep.subr.mxu0 0.0
          %2079 = vmatpush1.msra.mxu0 0.0
          %2080 = vmatprep.subr.mxu0 0.0
          %2081 = vmatpush1.msra.mxu0 0.0
          %2082 = vmatprep.mubr.f32.mxu0 0.0
          %v2083 = vand.u32 %v1727, 4294901760
          %v2084 = vsub.f32 %v1727, %v2083
          %2085 = vmatmul.mubr.f32.gmra.mrb[0].mxu0 %v2084
          %v2086 = vpop.f32.mrb[0].mxu0
          %v2087 = vadd.f32 %v1983, %v2086
          %v2088 = vpop.f32.mrb[0].mxu0
          %2089 = vdwg.mxu0
          %2090 = vmatprep.subr.mxu0 0.0
          %v2091 = vand.u32 %v1728, 4294901760
          %2092 = vmatpush1.msra.mxu0 %v2091
          %2093 = vmatprep.subr.mxu0 0.0
          %v2094 = vand.u32 %v1729, 4294901760
          %2095 = vmatpush1.msra.mxu0 %v2094
          %2096 = vmatprep.subr.mxu0 0.0
          %v2097 = vand.u32 %v1730, 4294901760
          %2098 = vmatpush1.msra.mxu0 %v2097
          %2099 = vmatprep.subr.mxu0 0.0
          %v2100 = vand.u32 %v1731, 4294901760
          %2101 = vmatpush1.msra.mxu0 %v2100
          %2102 = vmatprep.subr.mxu0 0.0
          %v2103 = vand.u32 %v1732, 4294901760
          %2104 = vmatpush1.msra.mxu0 %v2103
          %2105 = vmatprep.subr.mxu0 0.0
          %v2106 = vand.u32 %v1733, 4294901760
          %2107 = vmatpush1.msra.mxu0 %v2106
          %2108 = vmatprep.subr.mxu0 0.0
          %v2109 = vand.u32 %v1734, 4294901760
          %2110 = vmatpush1.msra.mxu0 %v2109
          %2111 = vmatprep.subr.mxu0 0.0
          %v2112 = vand.u32 %v1735, 4294901760
          %2113 = vmatpush1.msra.mxu0 %v2112
          %2114 = vmatprep.subr.mxu0 0.0
          %v2115 = vand.u32 %v1736, 4294901760
          %2116 = vmatpush1.msra.mxu0 %v2115
          %2117 = vmatprep.subr.mxu0 0.0
          %v2118 = vand.u32 %v1737, 4294901760
          %2119 = vmatpush1.msra.mxu0 %v2118
          %2120 = vmatprep.subr.mxu0 0.0
          %v2121 = vand.u32 %v1738, 4294901760
          %2122 = vmatpush1.msra.mxu0 %v2121
          %2123 = vmatprep.subr.mxu0 0.0
          %v2124 = vand.u32 %v1739, 4294901760
          %2125 = vmatpush1.msra.mxu0 %v2124
          %2126 = vmatprep.subr.mxu0 0.0
          %v2127 = vand.u32 %v1740, 4294901760
          %2128 = vmatpush1.msra.mxu0 %v2127
          %2129 = vmatprep.subr.mxu0 0.0
          %v2130 = vand.u32 %v1741, 4294901760
          %2131 = vmatpush1.msra.mxu0 %v2130
          %2132 = vmatprep.subr.mxu0 0.0
          %v2133 = vand.u32 %v1742, 4294901760
          %2134 = vmatpush1.msra.mxu0 %v2133
          %2135 = vmatprep.subr.mxu0 0.0
          %v2136 = vand.u32 %v1743, 4294901760
          %2137 = vmatpush1.msra.mxu0 %v2136
          %2138 = vmatprep.subr.mxu0 0.0
          %2139 = vmatpush1.msra.mxu0 0.0
          %2140 = vmatprep.subr.mxu0 0.0
          %2141 = vmatpush1.msra.mxu0 0.0
          %2142 = vmatprep.subr.mxu0 0.0
          %2143 = vmatpush1.msra.mxu0 0.0
          %2144 = vmatprep.subr.mxu0 0.0
          %2145 = vmatpush1.msra.mxu0 0.0
          %2146 = vmatprep.subr.mxu0 0.0
          %2147 = vmatpush1.msra.mxu0 0.0
          %2148 = vmatprep.subr.mxu0 0.0
          %2149 = vmatpush1.msra.mxu0 0.0
          %2150 = vmatprep.subr.mxu0 0.0
          %2151 = vmatpush1.msra.mxu0 0.0
          %2152 = vmatprep.subr.mxu0 0.0
          %2153 = vmatpush1.msra.mxu0 0.0
          %2154 = vmatprep.subr.mxu0 0.0
          %2155 = vmatpush1.msra.mxu0 0.0
          %2156 = vmatprep.subr.mxu0 0.0
          %2157 = vmatpush1.msra.mxu0 0.0
          %2158 = vmatprep.subr.mxu0 0.0
          %2159 = vmatpush1.msra.mxu0 0.0
          %2160 = vmatprep.subr.mxu0 0.0
          %2161 = vmatpush1.msra.mxu0 0.0
          %2162 = vmatprep.subr.mxu0 0.0
          %2163 = vmatpush1.msra.mxu0 0.0
          %2164 = vmatprep.subr.mxu0 0.0
          %2165 = vmatpush1.msra.mxu0 0.0
          %2166 = vmatprep.subr.mxu0 0.0
          %2167 = vmatpush1.msra.mxu0 0.0
          %2168 = vmatprep.subr.mxu0 0.0
          %2169 = vmatpush1.msra.mxu0 0.0
          %2170 = vmatprep.mubr.f32.mxu0 0.0
          %v2171 = vand.u32 %v1727, 4294901760
          %v2172 = vsub.f32 %v1727, %v2171
          %v2173 = vand.u32 %v2172, 4294901760
          %2174 = vmatmul.mubr.f32.gmra.mrb[0].mxu0 %v2173
          %v2175 = vpop.f32.mrb[0].mxu0
          %v2176 = vadd.f32 %v2087, %v2175
          %v2177 = vpop.f32.mrb[0].mxu0
          %2178 = vdwg.mxu0
          %2179 = vmatprep.subr.mxu0 0.0
          %v2180 = vand.u32 %v1728, 4294901760
          %v2181 = vsub.f32 %v1728, %v2180
          %v2182 = vand.u32 %v2181, 4294901760
          %2183 = vmatpush1.msra.mxu0 %v2182
          %2184 = vmatprep.subr.mxu0 0.0
          %v2185 = vand.u32 %v1729, 4294901760
          %v2186 = vsub.f32 %v1729, %v2185
          %v2187 = vand.u32 %v2186, 4294901760
          %2188 = vmatpush1.msra.mxu0 %v2187
          %2189 = vmatprep.subr.mxu0 0.0
          %v2190 = vand.u32 %v1730, 4294901760
          %v2191 = vsub.f32 %v1730, %v2190
          %v2192 = vand.u32 %v2191, 4294901760
          %2193 = vmatpush1.msra.mxu0 %v2192
          %2194 = vmatprep.subr.mxu0 0.0
          %v2195 = vand.u32 %v1731, 4294901760
          %v2196 = vsub.f32 %v1731, %v2195
          %v2197 = vand.u32 %v2196, 4294901760
          %2198 = vmatpush1.msra.mxu0 %v2197
          %2199 = vmatprep.subr.mxu0 0.0
          %v2200 = vand.u32 %v1732, 4294901760
          %v2201 = vsub.f32 %v1732, %v2200
          %v2202 = vand.u32 %v2201, 4294901760
          %2203 = vmatpush1.msra.mxu0 %v2202
          %2204 = vmatprep.subr.mxu0 0.0
          %v2205 = vand.u32 %v1733, 4294901760
          %v2206 = vsub.f32 %v1733, %v2205
          %v2207 = vand.u32 %v2206, 4294901760
          %2208 = vmatpush1.msra.mxu0 %v2207
          %2209 = vmatprep.subr.mxu0 0.0
          %v2210 = vand.u32 %v1734, 4294901760
          %v2211 = vsub.f32 %v1734, %v2210
          %v2212 = vand.u32 %v2211, 4294901760
          %2213 = vmatpush1.msra.mxu0 %v2212
          %2214 = vmatprep.subr.mxu0 0.0
          %v2215 = vand.u32 %v1735, 4294901760
          %v2216 = vsub.f32 %v1735, %v2215
          %v2217 = vand.u32 %v2216, 4294901760
          %2218 = vmatpush1.msra.mxu0 %v2217
          %2219 = vmatprep.subr.mxu0 0.0
          %v2220 = vand.u32 %v1736, 4294901760
          %v2221 = vsub.f32 %v1736, %v2220
          %v2222 = vand.u32 %v2221, 4294901760
          %2223 = vmatpush1.msra.mxu0 %v2222
          %2224 = vmatprep.subr.mxu0 0.0
          %v2225 = vand.u32 %v1737, 4294901760
          %v2226 = vsub.f32 %v1737, %v2225
          %v2227 = vand.u32 %v2226, 4294901760
          %2228 = vmatpush1.msra.mxu0 %v2227
          %2229 = vmatprep.subr.mxu0 0.0
          %v2230 = vand.u32 %v1738, 4294901760
          %v2231 = vsub.f32 %v1738, %v2230
          %v2232 = vand.u32 %v2231, 4294901760
          %2233 = vmatpush1.msra.mxu0 %v2232
          %2234 = vmatprep.subr.mxu0 0.0
          %v2235 = vand.u32 %v1739, 4294901760
          %v2236 = vsub.f32 %v1739, %v2235
          %v2237 = vand.u32 %v2236, 4294901760
          %2238 = vmatpush1.msra.mxu0 %v2237
          %2239 = vmatprep.subr.mxu0 0.0
          %v2240 = vand.u32 %v1740, 4294901760
          %v2241 = vsub.f32 %v1740, %v2240
          %v2242 = vand.u32 %v2241, 4294901760
          %2243 = vmatpush1.msra.mxu0 %v2242
          %2244 = vmatprep.subr.mxu0 0.0
          %v2245 = vand.u32 %v1741, 4294901760
          %v2246 = vsub.f32 %v1741, %v2245
          %v2247 = vand.u32 %v2246, 4294901760
          %2248 = vmatpush1.msra.mxu0 %v2247
          %2249 = vmatprep.subr.mxu0 0.0
          %v2250 = vand.u32 %v1742, 4294901760
          %v2251 = vsub.f32 %v1742, %v2250
          %v2252 = vand.u32 %v2251, 4294901760
          %2253 = vmatpush1.msra.mxu0 %v2252
          %2254 = vmatprep.subr.mxu0 0.0
          %v2255 = vand.u32 %v1743, 4294901760
          %v2256 = vsub.f32 %v1743, %v2255
          %v2257 = vand.u32 %v2256, 4294901760
          %2258 = vmatpush1.msra.mxu0 %v2257
          %2259 = vmatprep.subr.mxu0 0.0
          %2260 = vmatpush1.msra.mxu0 0.0
          %2261 = vmatprep.subr.mxu0 0.0
          %2262 = vmatpush1.msra.mxu0 0.0
          %2263 = vmatprep.subr.mxu0 0.0
          %2264 = vmatpush1.msra.mxu0 0.0
          %2265 = vmatprep.subr.mxu0 0.0
          %2266 = vmatpush1.msra.mxu0 0.0
          %2267 = vmatprep.subr.mxu0 0.0
          %2268 = vmatpush1.msra.mxu0 0.0
          %2269 = vmatprep.subr.mxu0 0.0
          %2270 = vmatpush1.msra.mxu0 0.0
          %2271 = vmatprep.subr.mxu0 0.0
          %2272 = vmatpush1.msra.mxu0 0.0
          %2273 = vmatprep.subr.mxu0 0.0
          %2274 = vmatpush1.msra.mxu0 0.0
          %2275 = vmatprep.subr.mxu0 0.0
          %2276 = vmatpush1.msra.mxu0 0.0
          %2277 = vmatprep.subr.mxu0 0.0
          %2278 = vmatpush1.msra.mxu0 0.0
          %2279 = vmatprep.subr.mxu0 0.0
          %2280 = vmatpush1.msra.mxu0 0.0
          %2281 = vmatprep.subr.mxu0 0.0
          %2282 = vmatpush1.msra.mxu0 0.0
          %2283 = vmatprep.subr.mxu0 0.0
          %2284 = vmatpush1.msra.mxu0 0.0
          %2285 = vmatprep.subr.mxu0 0.0
          %2286 = vmatpush1.msra.mxu0 0.0
          %2287 = vmatprep.subr.mxu0 0.0
          %2288 = vmatpush1.msra.mxu0 0.0
          %2289 = vmatprep.subr.mxu0 0.0
          %2290 = vmatpush1.msra.mxu0 0.0
          %2291 = vmatprep.mubr.f32.mxu0 0.0
          %v2292 = vand.u32 %v1727, 4294901760
          %2293 = vmatmul.mubr.f32.gmra.mrb[0].mxu0 %v2292
          %v2294 = vpop.f32.mrb[0].mxu0
          %v2295 = vadd.f32 %v2176, %v2294
          %v2296 = vpop.f32.mrb[0].mxu0
          %2297 = vdwg.mxu0
          %2298 = vmatprep.subr.mxu0 0.0
          %v2299 = vand.u32 %v1728, 4294901760
          %2300 = vmatpush1.msra.mxu0 %v2299
          %2301 = vmatprep.subr.mxu0 0.0
          %v2302 = vand.u32 %v1729, 4294901760
          %2303 = vmatpush1.msra.mxu0 %v2302
          %2304 = vmatprep.subr.mxu0 0.0
          %v2305 = vand.u32 %v1730, 4294901760
          %2306 = vmatpush1.msra.mxu0 %v2305
          %2307 = vmatprep.subr.mxu0 0.0
          %v2308 = vand.u32 %v1731, 4294901760
          %2309 = vmatpush1.msra.mxu0 %v2308
          %2310 = vmatprep.subr.mxu0 0.0
          %v2311 = vand.u32 %v1732, 4294901760
          %2312 = vmatpush1.msra.mxu0 %v2311
          %2313 = vmatprep.subr.mxu0 0.0
          %v2314 = vand.u32 %v1733, 4294901760
          %2315 = vmatpush1.msra.mxu0 %v2314
          %2316 = vmatprep.subr.mxu0 0.0
          %v2317 = vand.u32 %v1734, 4294901760
          %2318 = vmatpush1.msra.mxu0 %v2317
          %2319 = vmatprep.subr.mxu0 0.0
          %v2320 = vand.u32 %v1735, 4294901760
          %2321 = vmatpush1.msra.mxu0 %v2320
          %2322 = vmatprep.subr.mxu0 0.0
          %v2323 = vand.u32 %v1736, 4294901760
          %2324 = vmatpush1.msra.mxu0 %v2323
          %2325 = vmatprep.subr.mxu0 0.0
          %v2326 = vand.u32 %v1737, 4294901760
          %2327 = vmatpush1.msra.mxu0 %v2326
          %2328 = vmatprep.subr.mxu0 0.0
          %v2329 = vand.u32 %v1738, 4294901760
          %2330 = vmatpush1.msra.mxu0 %v2329
          %2331 = vmatprep.subr.mxu0 0.0
          %v2332 = vand.u32 %v1739, 4294901760
          %2333 = vmatpush1.msra.mxu0 %v2332
          %2334 = vmatprep.subr.mxu0 0.0
          %v2335 = vand.u32 %v1740, 4294901760
          %2336 = vmatpush1.msra.mxu0 %v2335
          %2337 = vmatprep.subr.mxu0 0.0
          %v2338 = vand.u32 %v1741, 4294901760
          %2339 = vmatpush1.msra.mxu0 %v2338
          %2340 = vmatprep.subr.mxu0 0.0
          %v2341 = vand.u32 %v1742, 4294901760
          %2342 = vmatpush1.msra.mxu0 %v2341
          %2343 = vmatprep.subr.mxu0 0.0
          %v2344 = vand.u32 %v1743, 4294901760
          %2345 = vmatpush1.msra.mxu0 %v2344
          %2346 = vmatprep.subr.mxu0 0.0
          %2347 = vmatpush1.msra.mxu0 0.0
          %2348 = vmatprep.subr.mxu0 0.0
          %2349 = vmatpush1.msra.mxu0 0.0
          %2350 = vmatprep.subr.mxu0 0.0
          %2351 = vmatpush1.msra.mxu0 0.0
          %2352 = vmatprep.subr.mxu0 0.0
          %2353 = vmatpush1.msra.mxu0 0.0
          %2354 = vmatprep.subr.mxu0 0.0
          %2355 = vmatpush1.msra.mxu0 0.0
          %2356 = vmatprep.subr.mxu0 0.0
          %2357 = vmatpush1.msra.mxu0 0.0
          %2358 = vmatprep.subr.mxu0 0.0
          %2359 = vmatpush1.msra.mxu0 0.0
          %2360 = vmatprep.subr.mxu0 0.0
          %2361 = vmatpush1.msra.mxu0 0.0
          %2362 = vmatprep.subr.mxu0 0.0
          %2363 = vmatpush1.msra.mxu0 0.0
          %2364 = vmatprep.subr.mxu0 0.0
          %2365 = vmatpush1.msra.mxu0 0.0
          %2366 = vmatprep.subr.mxu0 0.0
          %2367 = vmatpush1.msra.mxu0 0.0
          %2368 = vmatprep.subr.mxu0 0.0
          %2369 = vmatpush1.msra.mxu0 0.0
          %2370 = vmatprep.subr.mxu0 0.0
          %2371 = vmatpush1.msra.mxu0 0.0
          %2372 = vmatprep.subr.mxu0 0.0
          %2373 = vmatpush1.msra.mxu0 0.0
          %2374 = vmatprep.subr.mxu0 0.0
          %2375 = vmatpush1.msra.mxu0 0.0
          %2376 = vmatprep.subr.mxu0 0.0
          %2377 = vmatpush1.msra.mxu0 0.0
          %2378 = vmatprep.mubr.f32.mxu0 0.0
          %v2379 = vand.u32 %v1727, 4294901760
          %2380 = vmatmul.mubr.f32.gmra.mrb[0].mxu0 %v2379
          %v2381 = vpop.f32.mrb[0].mxu0
          %v2382 = vadd.f32 %v2295, %v2381
          %v2383 = vpop.f32.mrb[0].mxu0
          %2384 = vdwg.mxu0
          %2385 = vst [vmem:[%s155] sm:$0x1] %v2382
        $region36: #{haar_wavelet_block.1} parent=27 // pred_fallthru
          _
        %s2386 = sand.u32 %s85, 1
        %s2387 = scalar_lea.sflag [#allocation4], %s2386
        %s2388 = sand.u32 %s85, 1
        %s2389 = scalar_lea.vmem [#allocation3], %s2388
        // Predicated region
        $region37: #{haar_wavelet_block.1} parent=27 // pred_check
          %p2390 = pneg %p95
        $region38: #{haar_wavelet_block.1} parent=27 // pred_check_branch
          %2392 = sbr.rel (%p2390) target = $region40
        $region39: #{haar_wavelet_block.1} parent=27 // pred_region
          %s2394 = ssub.s32 16, 16
          %2395 = vsyncadd %s2387, %s2394
          %s2396 = smul.addr %s20, 16
          %s2397 = scalar_lea.hbm %s2, %s2396
          %s2399 = sshll.u32 %s2389, 4
          %s2400 = int_to_ptr.vmem [resolvable:$true] %s2399
          %2402 = dma.vmem_to_hbm [thread:$0]  %s2400, 16, %s2397, %s2387
        $region40: #{haar_wavelet_block.1} parent=27 // pred_fallthru
          _
      $region28: #{haar_wavelet_block.1} parent=5 // pred_fallthru
        _
      %p2403 = scmp.le.s32.totalorder 2, %s11
      // Predicated region
      $region41: #{haar_wavelet_block.1} parent=5 // pred_check
        %p2404 = pneg %p2403
      $region42: #{haar_wavelet_block.1} parent=5 // pred_check_branch
        %2406 = sbr.rel (%p2404) target = $region44
      $region43: #{haar_wavelet_block.1} parent=5 // pred_region
        %s2407 = ssub.s32 %s11, 2
        // Predicated region
        $region45: #{haar_wavelet_block.1} parent=43 // pred_check
          %p2408 = pneg %p101
        $region46: #{haar_wavelet_block.1} parent=43 // pred_check_branch
          %2410 = sbr.rel (%p2408) target = $region48
        $region47: #{haar_wavelet_block.1} parent=43 // pred_region
          %s2411 = sand.u32 %s86, 1
          %s2412 = scalar_lea.sflag [#allocation4], %s2411
          %s2413 = sand.u32 %s86, 1
          %s2414 = scalar_lea.vmem [#allocation3], %s2413
          %2415 = dma.done %s2412, 16
        $region48: #{haar_wavelet_block.1} parent=43 // pred_fallthru
          _
      $region44: #{haar_wavelet_block.1} parent=5 // pred_fallthru
        _
    $region6: #{haar_wavelet_block.1} parent=1 // loop_footer
      %s15 = sadd.s32 1, %s11
    $region7: #{haar_wavelet_block.1} parent=1 // loop_footer_branch
      %10 = sbr.rel target = $region3
    $region8: #{haar_wavelet_block.1} parent=1 // loop_exit
      _
    %2416 = vsyncpa [#allocation4], 1
    %s2417 = scalar_lea.sflag [#allocation4], 1
    %2418 = vsyncpa %s2417, 1

</llo_original>
